<compile_context>
chip_gen: v7x
topology: tpu7x:2x2x1
jax: 0.10.0
libtpu: 0.0.40
codegen_flags: <defaults>
</compile_context>

<pallas_src>
import jax
import jax.numpy as jnp
from jax.experimental import pallas as pl
from jax.experimental.pallas import tpu as pltpu

_LANE = 128
_SUBLANE = 8


def _round_up(x, m):
    return (x + m - 1) // m * m


def attentive_pooling_kernel(feats_ref, mask_ref, w1_ref, wa_ref, wfc_ref, bfc_ref,
                             attfeat_ref, attw_ref):
    Bt, A, D = feats_ref.shape
    feats = feats_ref[...]                                    # (Bt, A, D) bf16
    mask = mask_ref[...]                                      # (Bt, A)    f32

    # --- feat2att: one flattened MXU matmul (Bt*A, D) @ (D, D), f32 accumulate ---
    x2d = feats.reshape(Bt * A, D)
    h = jnp.dot(x2d, w1_ref[...], preferred_element_type=jnp.float32)
    h = jnp.tanh(h)                                           # f32 (EUP)

    # --- to_alpha (out dim 1): VPU multiply + lane reduce (no N=1 MXU matmul) ---
    h3 = h.reshape(Bt, A, D)
    alpha = jnp.sum(h3 * wa_ref[...], axis=-1)                # (Bt, A) f32

    # masked_fill(mask == 0, -1e9)
    alpha = jnp.where(mask == 0.0, jnp.float32(-1e9), alpha)

    # softmax over A (f32).  Fully-masked rows give a uniform distribution
    # (numerically stable), matching a max-subtracting softmax.
    m = jnp.max(alpha, axis=-1, keepdims=True)
    e = jnp.exp(alpha - m)
    attw = e / jnp.sum(e, axis=-1, keepdims=True)             # (Bt, A) f32
    attw_ref[...] = attw

    # --- weighted sum over A: broadcast multiply + sublane reduce (M=1 matmul avoided) ---
    att = jnp.sum(attw[:, :, None] * feats.astype(jnp.float32), axis=1)   # (Bt, D) f32

    # --- final fc: bf16 MXU matmul, f32 accumulate, f32 bias ---
    attfeat_ref[...] = jnp.dot(att.astype(jnp.bfloat16), wfc_ref[...],
                               preferred_element_type=jnp.float32) + bfc_ref[...]


def prepare_params(w_feat2att, w_to_alpha, w_fc, b_fc):
    """One-time weight prep: transpose to [in, out], cast matmul weights to bf16,
    pad everything lane-dense to a multiple of 128.  Call once, reuse per step."""
    D = w_feat2att.shape[0]
    Dp = _round_up(D, _LANE)
    w1 = jnp.zeros((Dp, Dp), jnp.bfloat16).at[:D, :D].set(
        jnp.transpose(w_feat2att).astype(jnp.bfloat16))
    # to_alpha weight is (1, D) in PyTorch layout: already the lane-dense row we need.
    wa = jnp.zeros((1, Dp), jnp.float32).at[:, :D].set(w_to_alpha.astype(jnp.float32))
    wfc = jnp.zeros((Dp, Dp), jnp.bfloat16).at[:D, :D].set(
        jnp.transpose(w_fc).astype(jnp.bfloat16))
    bfc = jnp.zeros((1, Dp), jnp.float32).at[:, :D].set(b_fc.astype(jnp.float32))
    return (w1, wa, wfc, bfc)


def attentive_pooling_forward(feats, f_masks, prepared, *, batch_tile=8):
    """feats: [B, A, D] or [B, W, H, D]; f_masks: [B, A] or None.
    prepared: output of prepare_params().  Returns (att_feats [B, D], attw [B, A])."""
    w1, wa, wfc, bfc = prepared
    if feats.ndim == 4:
        B, W, H, D = feats.shape
        feats = feats.reshape(B, W * H, D)
    B, A, D = feats.shape
    Dp = w1.shape[0]
    Ap = _round_up(A, _LANE)
    Bt = max(_SUBLANE, _round_up(min(batch_tile, B), _SUBLANE))
    Bp = _round_up(B, Bt)
    nb = Bp // Bt

    if f_masks is None:
        f_masks = jnp.ones((B, A), jnp.float32)
    # Zero-pad: padded A positions get mask==0 (-> -1e9 -> exp underflows to 0),
    # padded batch rows are all-zero and sliced off below — no NaNs either way.
    mask = jnp.zeros((Bp, Ap), jnp.float32).at[:B, :A].set(f_masks.astype(jnp.float32))
    x = jnp.zeros((Bp, Ap, Dp), jnp.bfloat16).at[:B, :A, :D].set(feats.astype(jnp.bfloat16))

    grid_spec = pl.GridSpec(
        grid=(nb,),
        in_specs=[
            pl.BlockSpec((Bt, Ap, Dp), lambda i: (i, 0, 0)),   # feats tile
            pl.BlockSpec((Bt, Ap),     lambda i: (i, 0)),      # mask tile
            pl.BlockSpec((Dp, Dp),     lambda i: (0, 0)),      # feat2att^T (resident)
            pl.BlockSpec((1, Dp),      lambda i: (0, 0)),      # to_alpha row (resident)
            pl.BlockSpec((Dp, Dp),     lambda i: (0, 0)),      # fc^T (resident)
            pl.BlockSpec((1, Dp),      lambda i: (0, 0)),      # fc bias (resident)
        ],
        out_specs=(
            pl.BlockSpec((Bt, Dp), lambda i: (i, 0)),
            pl.BlockSpec((Bt, Ap), lambda i: (i, 0)),
        ),
    )

    flops = 2 * Bp * Ap * Dp * Dp + 4 * Bp * Ap * Dp + 2 * Bp * Dp * Dp
    transcendentals = Bp * Ap * Dp + Bp * Ap
    bytes_accessed = (x.size * 2 + mask.size * 4
                      + (w1.size + wfc.size) * 2 + (wa.size + bfc.size) * 4
                      + Bp * Dp * 4 + Bp * Ap * 4)

    att_pad, attw_pad = pl.pallas_call(
        attentive_pooling_kernel,
        out_shape=(jax.ShapeDtypeStruct((Bp, Dp), jnp.float32),
                   jax.ShapeDtypeStruct((Bp, Ap), jnp.float32)),
        grid_spec=grid_spec,
        compiler_params=pltpu.CompilerParams(
            dimension_semantics=("parallel",),          # megacore sharding on v7x
            vmem_limit_bytes=32 * 1024 * 1024),         # safe on v5e/v6e/v7x (64 MiB phys)
        cost_estimate=pl.CostEstimate(flops=flops,
                                      transcendentals=transcendentals,
                                      bytes_accessed=bytes_accessed),
    )(x, mask, w1, wa, wfc, bfc)

    return att_pad[:B, :D], attw_pad[:B, :A]


def _reference(feats, f_masks, w_feat2att, w_to_alpha, w_fc, b_fc):
    """Pure-JAX f32 mirror of the PyTorch forward for a sanity check."""
    h = jnp.tanh(feats @ w_feat2att.T)
    alpha = (h @ w_to_alpha.T)[..., 0]
    if f_masks is not None:
        alpha = jnp.where(f_masks == 0.0, -1e9, alpha)
    attw = jax.nn.softmax(alpha, axis=1)
    att = jnp.einsum('ba,bad->bd', attw, feats)
    return att @ w_fc.T + b_fc, attw


if __name__ == "__main__":
    B, A, D = 2, 8, 32          # batch, num features (seq), hidden_dim
    key = jax.random.PRNGKey(0)
    k_feats, k_w1, k_wa, k_wfc, k_bfc = jax.random.split(key, 5)

    feats = jax.random.normal(k_feats, (B, A, D), dtype=jnp.float32)
    # mask: batch 0 fully valid, batch 1 has its last 3 positions masked out
    f_masks = jnp.concatenate(
        [jnp.ones((1, A), jnp.float32),
         jnp.concatenate([jnp.ones((1, A - 3)), jnp.zeros((1, 3))], axis=1)],
        axis=0)

    # deterministic parameter init (shapes from the module's __init__)
    scale = 1.0 / jnp.sqrt(jnp.float32(D))
    w_feat2att = jax.random.uniform(k_w1, (D, D), jnp.float32, -scale, scale)
    w_to_alpha = jax.random.uniform(k_wa, (1, D), jnp.float32, -scale, scale)
    w_fc = jax.random.uniform(k_wfc, (D, D), jnp.float32, -scale, scale)
    b_fc = jax.random.uniform(k_bfc, (D,), jnp.float32, -scale, scale)

    prepared = prepare_params(w_feat2att, w_to_alpha, w_fc, b_fc)   # one-time prep
    forward = jax.jit(attentive_pooling_forward, static_argnames=("batch_tile",))

    att_feats, attw = forward(feats, f_masks, prepared)
    jax.block_until_ready((att_feats, attw))

    ref_feats, ref_attw = _reference(feats, f_masks,
                                     w_feat2att, w_to_alpha, w_fc, b_fc)
    # bf16 matmul operands (f32 accumulation) -> compare against f32 reference
    # with bf16-appropriate tolerances.
    assert att_feats.shape == (B, D) and attw.shape == (B, A)
    assert jnp.allclose(att_feats, ref_feats, atol=2e-2, rtol=2e-2)
    assert jnp.allclose(attw, ref_attw, atol=5e-3, rtol=2e-2)

    print("KERNEL_OK")
</pallas_src>

<mosaic_0001>
module attributes {stable_mosaic.version = 11 : i64} {
  func.func @attentive_pooling_kernel(%arg0: i32, %arg1: memref<8x128x128xbf16, #tpu.memory_space<vmem>>, %arg2: memref<8x128xf32, #tpu.memory_space<vmem>>, %arg3: memref<128x128xbf16, #tpu.memory_space<vmem>>, %arg4: memref<1x128xf32, #tpu.memory_space<vmem>>, %arg5: memref<128x128xbf16, #tpu.memory_space<vmem>>, %arg6: memref<1x128xf32, #tpu.memory_space<vmem>>, %arg7: memref<8x128xf32, #tpu.memory_space<vmem>>, %arg8: memref<8x128xf32, #tpu.memory_space<vmem>>) attributes {dimension_semantics = [#tpu.dimension_semantics<parallel>], iteration_bounds = array<i64: 1>, scalar_prefetch = 0 : i64, scratch_operands = 0 : i64, tpu.core_type = #tpu.core_type<tc>, window_params = [{transform_indices = @transform_0, window_bounds = array<i64: 8, 128, 128>}, {transform_indices = @transform_1, window_bounds = array<i64: 8, 128>}, {pipeline_mode = #tpu.pipeline_mode<synchronous>, transform_indices = @transform_2, window_bounds = array<i64: 128, 128>}, {pipeline_mode = #tpu.pipeline_mode<synchronous>, transform_indices = @transform_3, window_bounds = array<i64: 1, 128>}, {pipeline_mode = #tpu.pipeline_mode<synchronous>, transform_indices = @transform_4, window_bounds = array<i64: 128, 128>}, {pipeline_mode = #tpu.pipeline_mode<synchronous>, transform_indices = @transform_5, window_bounds = array<i64: 1, 128>}, {transform_indices = @transform_6, window_bounds = array<i64: 8, 128>}, {transform_indices = @transform_7, window_bounds = array<i64: 8, 128>}]} {
    %c0 = arith.constant 0 : index
    %c0_0 = arith.constant 0 : index
    %c0_1 = arith.constant 0 : index
    %0 = vector.load %arg1[%c0, %c0_0, %c0_1] : memref<8x128x128xbf16, #tpu.memory_space<vmem>>, vector<8x128x128xbf16>
    %c0_2 = arith.constant 0 : index
    %c0_3 = arith.constant 0 : index
    %1 = vector.load %arg2[%c0_2, %c0_3] : memref<8x128xf32, #tpu.memory_space<vmem>>, vector<8x128xf32>
    %2 = vector.shape_cast %0 : vector<8x128x128xbf16> to vector<1024x128xbf16>
    %c0_4 = arith.constant 0 : index
    %c0_5 = arith.constant 0 : index
    %3 = vector.load %arg3[%c0_4, %c0_5] : memref<128x128xbf16, #tpu.memory_space<vmem>>, vector<128x128xbf16>
    %cst = arith.constant dense<0.000000e+00> : vector<1024x128xf32>
    %4 = tpu.matmul %2, %3, %cst {dimension_numbers = #tpu.dot_dimension_numbers<[1], [0], [0], [1], [0, 0, 1, 1], [], []>} : vector<1024x128xbf16>, vector<128x128xbf16>, vector<1024x128xf32> -> vector<1024x128xf32>
    %5 = math.tanh %4 : vector<1024x128xf32>
    %6 = vector.shape_cast %5 : vector<1024x128xf32> to vector<8x128x128xf32>
    %c0_6 = arith.constant 0 : index
    %c0_7 = arith.constant 0 : index
    %7 = vector.load %arg4[%c0_6, %c0_7] : memref<1x128xf32, #tpu.memory_space<vmem>>, vector<1x128xf32>
    %8 = vector.shape_cast %7 : vector<1x128xf32> to vector<1x1x128xf32>
    %9 = vector.broadcast %8 : vector<1x1x128xf32> to vector<8x128x128xf32>
    %10 = arith.mulf %6, %9 : vector<8x128x128xf32>
    %cst_8 = arith.constant dense<0.000000e+00> : vector<8x128xf32>
    %11 = vector.multi_reduction <add>, %10, %cst_8 [2] : vector<8x128x128xf32> to vector<8x128xf32>
    %cst_9 = arith.constant 0.000000e+00 : f32
    %12 = vector.broadcast %cst_9 : f32 to vector<8x128xf32>
    %13 = arith.cmpf oeq, %1, %12 : vector<8x128xf32>
    %cst_10 = arith.constant -1.000000e+09 : f32
    %14 = vector.broadcast %cst_10 : f32 to vector<8x128xf32>
    %15 = arith.select %13, %14, %11 : vector<8x128xi1>, vector<8x128xf32>
    %cst_11 = arith.constant dense<0xFF800000> : vector<8xf32>
    %16 = vector.multi_reduction <maximumf>, %15, %cst_11 [1] : vector<8x128xf32> to vector<8xf32>
    %17 = vector.shape_cast %16 : vector<8xf32> to vector<8x1xf32>
    %18 = vector.broadcast %17 : vector<8x1xf32> to vector<8x128xf32>
    %19 = arith.subf %15, %18 : vector<8x128xf32>
    %20 = math.exp %19 : vector<8x128xf32>
    %cst_12 = arith.constant dense<0.000000e+00> : vector<8xf32>
    %21 = vector.multi_reduction <add>, %20, %cst_12 [1] : vector<8x128xf32> to vector<8xf32>
    %22 = vector.shape_cast %21 : vector<8xf32> to vector<8x1xf32>
    %23 = vector.broadcast %22 : vector<8x1xf32> to vector<8x128xf32>
    %24 = arith.divf %20, %23 : vector<8x128xf32>
    %c0_13 = arith.constant 0 : index
    %c0_14 = arith.constant 0 : index
    %25 = vector.load %arg8[%c0_13, %c0_14] : memref<8x128xf32, #tpu.memory_space<vmem>>, vector<8x128xf32>
    tpu.vector_store %arg8[%c0_13, %c0_14], %24 {strides = array<i32>} : memref<8x128xf32, #tpu.memory_space<vmem>>, vector<8x128xf32>,
    %26 = vector.shape_cast %24 : vector<8x128xf32> to vector<8x128x1xf32>
    %27 = arith.extf %0 : vector<8x128x128xbf16> to vector<8x128x128xf32>
    %28 = vector.broadcast %26 : vector<8x128x1xf32> to vector<8x128x128xf32>
    %29 = arith.mulf %28, %27 : vector<8x128x128xf32>
    %cst_15 = arith.constant dense<0.000000e+00> : vector<8x128xf32>
    %30 = vector.multi_reduction <add>, %29, %cst_15 [1] : vector<8x128x128xf32> to vector<8x128xf32>
    %31 = arith.truncf %30 : vector<8x128xf32> to vector<8x128xbf16>
    %c0_16 = arith.constant 0 : index
    %c0_17 = arith.constant 0 : index
    %32 = vector.load %arg5[%c0_16, %c0_17] : memref<128x128xbf16, #tpu.memory_space<vmem>>, vector<128x128xbf16>
    %cst_18 = arith.constant dense<0.000000e+00> : vector<8x128xf32>
    %33 = tpu.matmul %31, %32, %cst_18 {dimension_numbers = #tpu.dot_dimension_numbers<[1], [0], [0], [1], [0, 0, 1, 1], [], []>} : vector<8x128xbf16>, vector<128x128xbf16>, vector<8x128xf32> -> vector<8x128xf32>
    %c0_19 = arith.constant 0 : index
    %c0_20 = arith.constant 0 : index
    %34 = vector.load %arg6[%c0_19, %c0_20] : memref<1x128xf32, #tpu.memory_space<vmem>>, vector<1x128xf32>
    %35 = vector.broadcast %34 : vector<1x128xf32> to vector<8x128xf32>
    %36 = arith.addf %33, %35 : vector<8x128xf32>
    %c0_21 = arith.constant 0 : index
    %c0_22 = arith.constant 0 : index
    %37 = vector.load %arg7[%c0_21, %c0_22] : memref<8x128xf32, #tpu.memory_space<vmem>>, vector<8x128xf32>
    tpu.vector_store %arg7[%c0_21, %c0_22], %36 {strides = array<i32>} : memref<8x128xf32, #tpu.memory_space<vmem>>, vector<8x128xf32>,
    return
  }
  func.func @transform_0(%arg0: i32) -> (i32, i32, i32) {
    %c0_i32 = arith.constant 0 : i32
    %c0_i32_0 = arith.constant 0 : i32
    %c0_i32_1 = arith.constant 0 : i32
    return %arg0, %c0_i32, %c0_i32_0 : i32, i32, i32
  }
  func.func @transform_1(%arg0: i32) -> (i32, i32) {
    %c0_i32 = arith.constant 0 : i32
    %c0_i32_0 = arith.constant 0 : i32
    return %arg0, %c0_i32 : i32, i32
  }
  func.func @transform_2(%arg0: i32) -> (i32, i32) {
    %c0_i32 = arith.constant 0 : i32
    %c0_i32_0 = arith.constant 0 : i32
    %c0_i32_1 = arith.constant 0 : i32
    return %c0_i32, %c0_i32_0 : i32, i32
  }
  func.func @transform_3(%arg0: i32) -> (i32, i32) {
    %c0_i32 = arith.constant 0 : i32
    %c0_i32_0 = arith.constant 0 : i32
    %c0_i32_1 = arith.constant 0 : i32
    return %c0_i32, %c0_i32_0 : i32, i32
  }
  func.func @transform_4(%arg0: i32) -> (i32, i32) {
    %c0_i32 = arith.constant 0 : i32
    %c0_i32_0 = arith.constant 0 : i32
    %c0_i32_1 = arith.constant 0 : i32
    return %c0_i32, %c0_i32_0 : i32, i32
  }
  func.func @transform_5(%arg0: i32) -> (i32, i32) {
    %c0_i32 = arith.constant 0 : i32
    %c0_i32_0 = arith.constant 0 : i32
    %c0_i32_1 = arith.constant 0 : i32
    return %c0_i32, %c0_i32_0 : i32, i32
  }
  func.func @transform_6(%arg0: i32) -> (i32, i32) {
    %c0_i32 = arith.constant 0 : i32
    %c0_i32_0 = arith.constant 0 : i32
    return %arg0, %c0_i32 : i32, i32
  }
  func.func @transform_7(%arg0: i32) -> (i32, i32) {
    %c0_i32 = arith.constant 0 : i32
    %c0_i32_0 = arith.constant 0 : i32
    return %arg0, %c0_i32 : i32, i32
  }
}

</mosaic_0001>

<llo_original>
// kernel: attentive_pooling_forward.1
$region0: #{attentive_pooling_forward.1}
  #allocation0 [shape = 'u32[]', space=smem, size = 0x4, offset = 0x4, fixed_abs, tag = 'smem constant byte address 0x4 - core index']
  #allocation1 [shape = 'u32[144,128]{1,0:T(1,128)}', space=vmem, size = 0x12000, scoped, tag = 'internal scratch']
  %s0 = inlined_call_operand.vmem [shape: bf16[8,128,128], index: 0, kind: input, shape index: {}]
  %s1 = inlined_call_operand.vmem [shape: f32[8,128], index: 1, kind: input, shape index: {}]
  %s2 = inlined_call_operand.vmem [shape: bf16[128,128], index: 2, kind: input, shape index: {}]
  %s3 = inlined_call_operand.vmem [shape: f32[1,128], index: 3, kind: input, shape index: {}]
  %s4 = inlined_call_operand.vmem [shape: bf16[128,128], index: 4, kind: input, shape index: {}]
  %s5 = inlined_call_operand.vmem [shape: f32[1,128], index: 5, kind: input, shape index: {}]
  %s6 = inlined_call_operand.vmem [shape: f32[8,128], index: 6, kind: output, shape index: {0}]
  %s7 = inlined_call_operand.vmem [shape: f32[8,128], index: 7, kind: output, shape index: {1}]
  %8 = xla_tuple %s6, %s7
  %s9 = sld [smem:[#allocation0]]
  $region42: #{attentive_pooling_forward.1} parent=0
    _
  %s11 = ssub.s32 1, %s9
  %s12 = scalar_select 0, %s11, %s9
  // Predicated region
  $region2: #{attentive_pooling_forward.1} parent=0 // pred_check
    _
  $region3: #{attentive_pooling_forward.1} parent=0 // pred_check_branch
    %14 = sbr.rel (0) target = $region5
  $region4: #{attentive_pooling_forward.1} parent=0 // pred_region
    _
  $region5: #{attentive_pooling_forward.1} parent=0 // pred_fallthru
    _
  // Predicated region
  $region6: #{attentive_pooling_forward.1} parent=0 // pred_check
    _
  $region7: #{attentive_pooling_forward.1} parent=0 // pred_check_branch
    %16 = sbr.rel (0) target = $region9
  $region8: #{attentive_pooling_forward.1} parent=0 // pred_region
    _
  $region9: #{attentive_pooling_forward.1} parent=0 // pred_fallthru
    _
  // Predicated region
  $region10: #{attentive_pooling_forward.1} parent=0 // pred_check
    _
  $region11: #{attentive_pooling_forward.1} parent=0 // pred_check_branch
    %18 = sbr.rel (0) target = $region13
  $region12: #{attentive_pooling_forward.1} parent=0 // pred_region
    _
  $region13: #{attentive_pooling_forward.1} parent=0 // pred_fallthru
    _
  // Predicated region
  $region14: #{attentive_pooling_forward.1} parent=0 // pred_check
    _
  $region15: #{attentive_pooling_forward.1} parent=0 // pred_check_branch
    %20 = sbr.rel (0) target = $region17
  $region16: #{attentive_pooling_forward.1} parent=0 // pred_region
    _
  $region17: #{attentive_pooling_forward.1} parent=0 // pred_fallthru
    _
  // Predicated region
  $region18: #{attentive_pooling_forward.1} parent=0 // pred_check
    _
  $region19: #{attentive_pooling_forward.1} parent=0 // pred_check_branch
    %22 = sbr.rel (0) target = $region21
  $region20: #{attentive_pooling_forward.1} parent=0 // pred_region
    _
  $region21: #{attentive_pooling_forward.1} parent=0 // pred_fallthru
    _
  // Predicated region
  $region22: #{attentive_pooling_forward.1} parent=0 // pred_check
    _
  $region23: #{attentive_pooling_forward.1} parent=0 // pred_check_branch
    %24 = sbr.rel (0) target = $region25
  $region24: #{attentive_pooling_forward.1} parent=0 // pred_region
    _
  $region25: #{attentive_pooling_forward.1} parent=0 // pred_fallthru
    _
  %v26 = vld [vmem:[%s0] sm:$0xf]
  %v27 = vld [vmem:[%s0 + $0x4] sm:$0xf]
  %v28 = vld [vmem:[%s0 + $0x8] sm:$0xf]
  %v29 = vld [vmem:[%s0 + $0xc] sm:$0xf]
  %v30 = vld [vmem:[%s0 + $0x10] sm:$0xf]
  %v31 = vld [vmem:[%s0 + $0x14] sm:$0xf]
  %v32 = vld [vmem:[%s0 + $0x18] sm:$0xf]
  %v33 = vld [vmem:[%s0 + $0x1c] sm:$0xf]
  %v34 = vld [vmem:[%s0 + $0x20] sm:$0xf]
  %v35 = vld [vmem:[%s0 + $0x24] sm:$0xf]
  %v36 = vld [vmem:[%s0 + $0x28] sm:$0xf]
  %v37 = vld [vmem:[%s0 + $0x2c] sm:$0xf]
  %v38 = vld [vmem:[%s0 + $0x30] sm:$0xf]
  %v39 = vld [vmem:[%s0 + $0x34] sm:$0xf]
  %v40 = vld [vmem:[%s0 + $0x38] sm:$0xf]
  %v41 = vld [vmem:[%s0 + $0x3c] sm:$0xf]
  %v42 = vld [vmem:[%s0 + $0x40] sm:$0xf]
  %v43 = vld [vmem:[%s0 + $0x44] sm:$0xf]
  %v44 = vld [vmem:[%s0 + $0x48] sm:$0xf]
  %v45 = vld [vmem:[%s0 + $0x4c] sm:$0xf]
  %v46 = vld [vmem:[%s0 + $0x50] sm:$0xf]
  %v47 = vld [vmem:[%s0 + $0x54] sm:$0xf]
  %v48 = vld [vmem:[%s0 + $0x58] sm:$0xf]
  %v49 = vld [vmem:[%s0 + $0x5c] sm:$0xf]
  %v50 = vld [vmem:[%s0 + $0x60] sm:$0xf]
  %v51 = vld [vmem:[%s0 + $0x64] sm:$0xf]
  %v52 = vld [vmem:[%s0 + $0x68] sm:$0xf]
  %v53 = vld [vmem:[%s0 + $0x6c] sm:$0xf]
  %v54 = vld [vmem:[%s0 + $0x70] sm:$0xf]
  %v55 = vld [vmem:[%s0 + $0x74] sm:$0xf]
  %v56 = vld [vmem:[%s0 + $0x78] sm:$0xf]
  %v57 = vld [vmem:[%s0 + $0x7c] sm:$0xf]
  %v58 = vld [vmem:[%s0 + $0x80] sm:$0xf]
  %v59 = vld [vmem:[%s0 + $0x84] sm:$0xf]
  %v60 = vld [vmem:[%s0 + $0x88] sm:$0xf]
  %v61 = vld [vmem:[%s0 + $0x8c] sm:$0xf]
  %v62 = vld [vmem:[%s0 + $0x90] sm:$0xf]
  %v63 = vld [vmem:[%s0 + $0x94] sm:$0xf]
  %v64 = vld [vmem:[%s0 + $0x98] sm:$0xf]
  %v65 = vld [vmem:[%s0 + $0x9c] sm:$0xf]
  %v66 = vld [vmem:[%s0 + $0xa0] sm:$0xf]
  %v67 = vld [vmem:[%s0 + $0xa4] sm:$0xf]
  %v68 = vld [vmem:[%s0 + $0xa8] sm:$0xf]
  %v69 = vld [vmem:[%s0 + $0xac] sm:$0xf]
  %v70 = vld [vmem:[%s0 + $0xb0] sm:$0xf]
  %v71 = vld [vmem:[%s0 + $0xb4] sm:$0xf]
  %v72 = vld [vmem:[%s0 + $0xb8] sm:$0xf]
  %v73 = vld [vmem:[%s0 + $0xbc] sm:$0xf]
  %v74 = vld [vmem:[%s0 + $0xc0] sm:$0xf]
  %v75 = vld [vmem:[%s0 + $0xc4] sm:$0xf]
  %v76 = vld [vmem:[%s0 + $0xc8] sm:$0xf]
  %v77 = vld [vmem:[%s0 + $0xcc] sm:$0xf]
  %v78 = vld [vmem:[%s0 + $0xd0] sm:$0xf]
  %v79 = vld [vmem:[%s0 + $0xd4] sm:$0xf]
  %v80 = vld [vmem:[%s0 + $0xd8] sm:$0xf]
  %v81 = vld [vmem:[%s0 + $0xdc] sm:$0xf]
  %v82 = vld [vmem:[%s0 + $0xe0] sm:$0xf]
  %v83 = vld [vmem:[%s0 + $0xe4] sm:$0xf]
  %v84 = vld [vmem:[%s0 + $0xe8] sm:$0xf]
  %v85 = vld [vmem:[%s0 + $0xec] sm:$0xf]
  %v86 = vld [vmem:[%s0 + $0xf0] sm:$0xf]
  %v87 = vld [vmem:[%s0 + $0xf4] sm:$0xf]
  %v88 = vld [vmem:[%s0 + $0xf8] sm:$0xf]
  %v89 = vld [vmem:[%s0 + $0xfc] sm:$0xf]
  %v90 = vld [vmem:[%s0 + $0x100] sm:$0xf]
  %v91 = vld [vmem:[%s0 + $0x104] sm:$0xf]
  %v92 = vld [vmem:[%s0 + $0x108] sm:$0xf]
  %v93 = vld [vmem:[%s0 + $0x10c] sm:$0xf]
  %v94 = vld [vmem:[%s0 + $0x110] sm:$0xf]
  %v95 = vld [vmem:[%s0 + $0x114] sm:$0xf]
  %v96 = vld [vmem:[%s0 + $0x118] sm:$0xf]
  %v97 = vld [vmem:[%s0 + $0x11c] sm:$0xf]
  %v98 = vld [vmem:[%s0 + $0x120] sm:$0xf]
  %v99 = vld [vmem:[%s0 + $0x124] sm:$0xf]
  %v100 = vld [vmem:[%s0 + $0x128] sm:$0xf]
  %v101 = vld [vmem:[%s0 + $0x12c] sm:$0xf]
  %v102 = vld [vmem:[%s0 + $0x130] sm:$0xf]
  %v103 = vld [vmem:[%s0 + $0x134] sm:$0xf]
  %v104 = vld [vmem:[%s0 + $0x138] sm:$0xf]
  %v105 = vld [vmem:[%s0 + $0x13c] sm:$0xf]
  %v106 = vld [vmem:[%s0 + $0x140] sm:$0xf]
  %v107 = vld [vmem:[%s0 + $0x144] sm:$0xf]
  %v108 = vld [vmem:[%s0 + $0x148] sm:$0xf]
  %v109 = vld [vmem:[%s0 + $0x14c] sm:$0xf]
  %v110 = vld [vmem:[%s0 + $0x150] sm:$0xf]
  %v111 = vld [vmem:[%s0 + $0x154] sm:$0xf]
  %v112 = vld [vmem:[%s0 + $0x158] sm:$0xf]
  %v113 = vld [vmem:[%s0 + $0x15c] sm:$0xf]
  %v114 = vld [vmem:[%s0 + $0x160] sm:$0xf]
  %v115 = vld [vmem:[%s0 + $0x164] sm:$0xf]
  %v116 = vld [vmem:[%s0 + $0x168] sm:$0xf]
  %v117 = vld [vmem:[%s0 + $0x16c] sm:$0xf]
  %v118 = vld [vmem:[%s0 + $0x170] sm:$0xf]
  %v119 = vld [vmem:[%s0 + $0x174] sm:$0xf]
  %v120 = vld [vmem:[%s0 + $0x178] sm:$0xf]
  %v121 = vld [vmem:[%s0 + $0x17c] sm:$0xf]
  %v122 = vld [vmem:[%s0 + $0x180] sm:$0xf]
  %v123 = vld [vmem:[%s0 + $0x184] sm:$0xf]
  %v124 = vld [vmem:[%s0 + $0x188] sm:$0xf]
  %v125 = vld [vmem:[%s0 + $0x18c] sm:$0xf]
  %v126 = vld [vmem:[%s0 + $0x190] sm:$0xf]
  %v127 = vld [vmem:[%s0 + $0x194] sm:$0xf]
  %v128 = vld [vmem:[%s0 + $0x198] sm:$0xf]
  %v129 = vld [vmem:[%s0 + $0x19c] sm:$0xf]
  %v130 = vld [vmem:[%s0 + $0x1a0] sm:$0xf]
  %v131 = vld [vmem:[%s0 + $0x1a4] sm:$0xf]
  %v132 = vld [vmem:[%s0 + $0x1a8] sm:$0xf]
  %v133 = vld [vmem:[%s0 + $0x1ac] sm:$0xf]
  %v134 = vld [vmem:[%s0 + $0x1b0] sm:$0xf]
  %v135 = vld [vmem:[%s0 + $0x1b4] sm:$0xf]
  %v136 = vld [vmem:[%s0 + $0x1b8] sm:$0xf]
  %v137 = vld [vmem:[%s0 + $0x1bc] sm:$0xf]
  %v138 = vld [vmem:[%s0 + $0x1c0] sm:$0xf]
  %v139 = vld [vmem:[%s0 + $0x1c4] sm:$0xf]
  %v140 = vld [vmem:[%s0 + $0x1c8] sm:$0xf]
  %v141 = vld [vmem:[%s0 + $0x1cc] sm:$0xf]
  %v142 = vld [vmem:[%s0 + $0x1d0] sm:$0xf]
  %v143 = vld [vmem:[%s0 + $0x1d4] sm:$0xf]
  %v144 = vld [vmem:[%s0 + $0x1d8] sm:$0xf]
  %v145 = vld [vmem:[%s0 + $0x1dc] sm:$0xf]
  %v146 = vld [vmem:[%s0 + $0x1e0] sm:$0xf]
  %v147 = vld [vmem:[%s0 + $0x1e4] sm:$0xf]
  %v148 = vld [vmem:[%s0 + $0x1e8] sm:$0xf]
  %v149 = vld [vmem:[%s0 + $0x1ec] sm:$0xf]
  %v150 = vld [vmem:[%s0 + $0x1f0] sm:$0xf]
  %v151 = vld [vmem:[%s0 + $0x1f4] sm:$0xf]
  %v152 = vld [vmem:[%s0 + $0x1f8] sm:$0xf]
  %v153 = vld [vmem:[%s0 + $0x1fc] sm:$0xf]
  %v154 = vld [vmem:[%s1] sm:$0xff]
  %v155 = vld [vmem:[%s2] sm:$0xf]
  %v156 = vld [vmem:[%s2 + $0x4] sm:$0xf]
  %v157 = vld [vmem:[%s2 + $0x8] sm:$0xf]
  %v158 = vld [vmem:[%s2 + $0xc] sm:$0xf]
  %v159 = vld [vmem:[%s2 + $0x10] sm:$0xf]
  %v160 = vld [vmem:[%s2 + $0x14] sm:$0xf]
  %v161 = vld [vmem:[%s2 + $0x18] sm:$0xf]
  %v162 = vld [vmem:[%s2 + $0x1c] sm:$0xf]
  %v163 = vld [vmem:[%s2 + $0x20] sm:$0xf]
  %v164 = vld [vmem:[%s2 + $0x24] sm:$0xf]
  %v165 = vld [vmem:[%s2 + $0x28] sm:$0xf]
  %v166 = vld [vmem:[%s2 + $0x2c] sm:$0xf]
  %v167 = vld [vmem:[%s2 + $0x30] sm:$0xf]
  %v168 = vld [vmem:[%s2 + $0x34] sm:$0xf]
  %v169 = vld [vmem:[%s2 + $0x38] sm:$0xf]
  %v170 = vld [vmem:[%s2 + $0x3c] sm:$0xf]
  %v299 = vunpack.c.l.b16 %v26
  %v300 = vunpack.c.l.b16 %v27
  %v301 = vunpack.c.l.b16 %v28
  %v302 = vunpack.c.l.b16 %v29
  %v303 = vunpack.c.l.b16 %v30
  %v304 = vunpack.c.l.b16 %v31
  %v305 = vunpack.c.l.b16 %v32
  %v306 = vunpack.c.l.b16 %v33
  %v307 = vunpack.c.l.b16 %v34
  %v308 = vunpack.c.l.b16 %v35
  %v309 = vunpack.c.l.b16 %v36
  %v310 = vunpack.c.l.b16 %v37
  %v311 = vunpack.c.l.b16 %v38
  %v312 = vunpack.c.l.b16 %v39
  %v313 = vunpack.c.l.b16 %v40
  %v314 = vunpack.c.l.b16 %v41
  %v315 = vunpack.c.l.b16 %v42
  %v316 = vunpack.c.l.b16 %v43
  %v317 = vunpack.c.l.b16 %v44
  %v318 = vunpack.c.l.b16 %v45
  %v319 = vunpack.c.l.b16 %v46
  %v320 = vunpack.c.l.b16 %v47
  %v321 = vunpack.c.l.b16 %v48
  %v322 = vunpack.c.l.b16 %v49
  %v323 = vunpack.c.l.b16 %v50
  %v324 = vunpack.c.l.b16 %v51
  %v325 = vunpack.c.l.b16 %v52
  %v326 = vunpack.c.l.b16 %v53
  %v327 = vunpack.c.l.b16 %v54
  %v328 = vunpack.c.l.b16 %v55
  %v329 = vunpack.c.l.b16 %v56
  %v330 = vunpack.c.l.b16 %v57
  %v331 = vunpack.c.l.b16 %v58
  %v332 = vunpack.c.l.b16 %v59
  %v333 = vunpack.c.l.b16 %v60
  %v334 = vunpack.c.l.b16 %v61
  %v335 = vunpack.c.l.b16 %v62
  %v336 = vunpack.c.l.b16 %v63
  %v337 = vunpack.c.l.b16 %v64
  %v338 = vunpack.c.l.b16 %v65
  %v339 = vunpack.c.l.b16 %v66
  %v340 = vunpack.c.l.b16 %v67
  %v341 = vunpack.c.l.b16 %v68
  %v342 = vunpack.c.l.b16 %v69
  %v343 = vunpack.c.l.b16 %v70
  %v344 = vunpack.c.l.b16 %v71
  %v345 = vunpack.c.l.b16 %v72
  %v346 = vunpack.c.l.b16 %v73
  %v347 = vunpack.c.l.b16 %v74
  %v348 = vunpack.c.l.b16 %v75
  %v349 = vunpack.c.l.b16 %v76
  %v350 = vunpack.c.l.b16 %v77
  %v351 = vunpack.c.l.b16 %v78
  %v352 = vunpack.c.l.b16 %v79
  %v353 = vunpack.c.l.b16 %v80
  %v354 = vunpack.c.l.b16 %v81
  %v355 = vunpack.c.l.b16 %v82
  %v356 = vunpack.c.l.b16 %v83
  %v357 = vunpack.c.l.b16 %v84
  %v358 = vunpack.c.l.b16 %v85
  %v359 = vunpack.c.l.b16 %v86
  %v360 = vunpack.c.l.b16 %v87
  %v361 = vunpack.c.l.b16 %v88
  %v362 = vunpack.c.l.b16 %v89
  %v363 = vunpack.c.l.b16 %v90
  %v364 = vunpack.c.l.b16 %v91
  %v365 = vunpack.c.l.b16 %v92
  %v366 = vunpack.c.l.b16 %v93
  %v367 = vunpack.c.l.b16 %v94
  %v368 = vunpack.c.l.b16 %v95
  %v369 = vunpack.c.l.b16 %v96
  %v370 = vunpack.c.l.b16 %v97
  %v371 = vunpack.c.l.b16 %v98
  %v372 = vunpack.c.l.b16 %v99
  %v373 = vunpack.c.l.b16 %v100
  %v374 = vunpack.c.l.b16 %v101
  %v375 = vunpack.c.l.b16 %v102
  %v376 = vunpack.c.l.b16 %v103
  %v377 = vunpack.c.l.b16 %v104
  %v378 = vunpack.c.l.b16 %v105
  %v379 = vunpack.c.l.b16 %v106
  %v380 = vunpack.c.l.b16 %v107
  %v381 = vunpack.c.l.b16 %v108
  %v382 = vunpack.c.l.b16 %v109
  %v383 = vunpack.c.l.b16 %v110
  %v384 = vunpack.c.l.b16 %v111
  %v385 = vunpack.c.l.b16 %v112
  %v386 = vunpack.c.l.b16 %v113
  %v387 = vunpack.c.l.b16 %v114
  %v388 = vunpack.c.l.b16 %v115
  %v389 = vunpack.c.l.b16 %v116
  %v390 = vunpack.c.l.b16 %v117
  %v391 = vunpack.c.l.b16 %v118
  %v392 = vunpack.c.l.b16 %v119
  %v393 = vunpack.c.l.b16 %v120
  %v394 = vunpack.c.l.b16 %v121
  %v395 = vunpack.c.l.b16 %v122
  %v396 = vunpack.c.l.b16 %v123
  %v397 = vunpack.c.l.b16 %v124
  %v398 = vunpack.c.l.b16 %v125
  %v399 = vunpack.c.l.b16 %v126
  %v400 = vunpack.c.l.b16 %v127
  %v401 = vunpack.c.l.b16 %v128
  %v402 = vunpack.c.l.b16 %v129
  %v403 = vunpack.c.l.b16 %v130
  %v404 = vunpack.c.l.b16 %v131
  %v405 = vunpack.c.l.b16 %v132
  %v406 = vunpack.c.l.b16 %v133
  %v407 = vunpack.c.l.b16 %v134
  %v408 = vunpack.c.l.b16 %v135
  %v409 = vunpack.c.l.b16 %v136
  %v410 = vunpack.c.l.b16 %v137
  %v411 = vunpack.c.l.b16 %v138
  %v412 = vunpack.c.l.b16 %v139
  %v413 = vunpack.c.l.b16 %v140
  %v414 = vunpack.c.l.b16 %v141
  %v415 = vunpack.c.l.b16 %v142
  %v416 = vunpack.c.l.b16 %v143
  %v417 = vunpack.c.l.b16 %v144
  %v418 = vunpack.c.l.b16 %v145
  %v419 = vunpack.c.l.b16 %v146
  %v420 = vunpack.c.l.b16 %v147
  %v421 = vunpack.c.l.b16 %v148
  %v422 = vunpack.c.l.b16 %v149
  %v423 = vunpack.c.l.b16 %v150
  %v424 = vunpack.c.l.b16 %v151
  %v425 = vunpack.c.l.b16 %v152
  %v426 = vunpack.c.l.b16 %v153
  %v427 = vpack.c.b16 %v300, %v299
  %v428 = vpack.c.b16 %v302, %v301
  %v429 = vpack.c.b16 %v304, %v303
  %v430 = vpack.c.b16 %v306, %v305
  %v431 = vpack.c.b16 %v308, %v307
  %v432 = vpack.c.b16 %v310, %v309
  %v433 = vpack.c.b16 %v312, %v311
  %v434 = vpack.c.b16 %v314, %v313
  %v435 = vpack.c.b16 %v316, %v315
  %v436 = vpack.c.b16 %v318, %v317
  %v437 = vpack.c.b16 %v320, %v319
  %v438 = vpack.c.b16 %v322, %v321
  %v439 = vpack.c.b16 %v324, %v323
  %v440 = vpack.c.b16 %v326, %v325
  %v441 = vpack.c.b16 %v328, %v327
  %v442 = vpack.c.b16 %v330, %v329
  %v443 = vpack.c.b16 %v332, %v331
  %v444 = vpack.c.b16 %v334, %v333
  %v445 = vpack.c.b16 %v336, %v335
  %v446 = vpack.c.b16 %v338, %v337
  %v447 = vpack.c.b16 %v340, %v339
  %v448 = vpack.c.b16 %v342, %v341
  %v449 = vpack.c.b16 %v344, %v343
  %v450 = vpack.c.b16 %v346, %v345
  %v451 = vpack.c.b16 %v348, %v347
  %v452 = vpack.c.b16 %v350, %v349
  %v453 = vpack.c.b16 %v352, %v351
  %v454 = vpack.c.b16 %v354, %v353
  %v455 = vpack.c.b16 %v356, %v355
  %v456 = vpack.c.b16 %v358, %v357
  %v457 = vpack.c.b16 %v360, %v359
  %v458 = vpack.c.b16 %v362, %v361
  %v459 = vpack.c.b16 %v364, %v363
  %v460 = vpack.c.b16 %v366, %v365
  %v461 = vpack.c.b16 %v368, %v367
  %v462 = vpack.c.b16 %v370, %v369
  %v463 = vpack.c.b16 %v372, %v371
  %v464 = vpack.c.b16 %v374, %v373
  %v465 = vpack.c.b16 %v376, %v375
  %v466 = vpack.c.b16 %v378, %v377
  %v467 = vpack.c.b16 %v380, %v379
  %v468 = vpack.c.b16 %v382, %v381
  %v469 = vpack.c.b16 %v384, %v383
  %v470 = vpack.c.b16 %v386, %v385
  %v471 = vpack.c.b16 %v388, %v387
  %v472 = vpack.c.b16 %v390, %v389
  %v473 = vpack.c.b16 %v392, %v391
  %v474 = vpack.c.b16 %v394, %v393
  %v475 = vpack.c.b16 %v396, %v395
  %v476 = vpack.c.b16 %v398, %v397
  %v477 = vpack.c.b16 %v400, %v399
  %v478 = vpack.c.b16 %v402, %v401
  %v479 = vpack.c.b16 %v404, %v403
  %v480 = vpack.c.b16 %v406, %v405
  %v481 = vpack.c.b16 %v408, %v407
  %v482 = vpack.c.b16 %v410, %v409
  %v483 = vpack.c.b16 %v412, %v411
  %v484 = vpack.c.b16 %v414, %v413
  %v485 = vpack.c.b16 %v416, %v415
  %v486 = vpack.c.b16 %v418, %v417
  %v487 = vpack.c.b16 %v420, %v419
  %v488 = vpack.c.b16 %v422, %v421
  %v489 = vpack.c.b16 %v424, %v423
  %v490 = vpack.c.b16 %v426, %v425
  %v571 = vunpack.c.l.b16 %v155
  %v572 = vunpack.c.l.b16 %v156
  %v573 = vunpack.c.l.b16 %v157
  %v574 = vunpack.c.l.b16 %v158
  %v575 = vunpack.c.l.b16 %v159
  %v576 = vunpack.c.l.b16 %v160
  %v577 = vunpack.c.l.b16 %v161
  %v578 = vunpack.c.l.b16 %v162
  %v579 = vunpack.c.l.b16 %v163
  %v580 = vunpack.c.l.b16 %v164
  %v581 = vunpack.c.l.b16 %v165
  %v582 = vunpack.c.l.b16 %v166
  %v583 = vunpack.c.l.b16 %v167
  %v584 = vunpack.c.l.b16 %v168
  %v585 = vunpack.c.l.b16 %v169
  %v586 = vunpack.c.l.b16 %v170
  %v587 = vpack.c.b16 %v572, %v571
  %v588 = vpack.c.b16 %v574, %v573
  %v589 = vpack.c.b16 %v576, %v575
  %v590 = vpack.c.b16 %v578, %v577
  %v591 = vpack.c.b16 %v580, %v579
  %v592 = vpack.c.b16 %v582, %v581
  %v593 = vpack.c.b16 %v584, %v583
  %v594 = vpack.c.b16 %v586, %v585
  %603 = vmatprep.subr.bf16.mxu0 0
  %604 = vmatpush1.bf16.msra.mxu0 %v587
  %605 = vmatprep.subr.bf16.mxu0 0
  %606 = vmatpush1.bf16.msra.mxu0 %v588
  %607 = vmatprep.subr.bf16.mxu0 0
  %608 = vmatpush1.bf16.msra.mxu0 %v589
  %609 = vmatprep.subr.bf16.mxu0 0
  %610 = vmatpush1.bf16.msra.mxu0 %v590
  %611 = vmatprep.subr.bf16.mxu0 0
  %612 = vmatpush1.bf16.msra.mxu0 %v591
  %613 = vmatprep.subr.bf16.mxu0 0
  %614 = vmatpush1.bf16.msra.mxu0 %v592
  %615 = vmatprep.subr.bf16.mxu0 0
  %616 = vmatpush1.bf16.msra.mxu0 %v593
  %617 = vmatprep.subr.bf16.mxu0 0
  %618 = vmatpush1.bf16.msra.mxu0 %v594
  %619 = vmatprep.subr.bf16.mxu0 0
  %620 = vmatpush1.bf16.msra.mxu0 0
  %621 = vmatprep.subr.bf16.mxu0 0
  %622 = vmatpush1.bf16.msra.mxu0 0
  %623 = vmatprep.subr.bf16.mxu0 0
  %624 = vmatpush1.bf16.msra.mxu0 0
  %625 = vmatprep.subr.bf16.mxu0 0
  %626 = vmatpush1.bf16.msra.mxu0 0
  %627 = vmatprep.subr.bf16.mxu0 0
  %628 = vmatpush1.bf16.msra.mxu0 0
  %629 = vmatprep.subr.bf16.mxu0 0
  %630 = vmatpush1.bf16.msra.mxu0 0
  %631 = vmatprep.subr.bf16.mxu0 0
  %632 = vmatpush1.bf16.msra.mxu0 0
  %633 = vmatprep.subr.bf16.mxu0 0
  %634 = vmatpush1.bf16.msra.mxu0 0
  %635 = vmatprep.mubr.bf16.mxu0 0
  %636 = vmatmul.mubr.bf16.gmra.mrb[0].mxu0 %v427
  %v637 = vpop.f32.mrb[0].mxu0
  %v638 = vadd.f32 0.0, %v637
  %v639 = vpop.f32.mrb[0].mxu0
  %v640 = vpop.f32.mrb[0].mxu0
  %v641 = vadd.f32 0.0, %v640
  %v642 = vpop.f32.mrb[0].mxu0
  %643 = vmatprep.mubr.bf16.mxu0 0
  %644 = vmatmul.mubr.bf16.gmra.mrb[0].mxu0 %v428
  %v645 = vpop.f32.mrb[0].mxu0
  %v646 = vadd.f32 0.0, %v645
  %v647 = vpop.f32.mrb[0].mxu0
  %v648 = vpop.f32.mrb[0].mxu0
  %v649 = vadd.f32 0.0, %v648
  %v650 = vpop.f32.mrb[0].mxu0
  %651 = vmatprep.mubr.bf16.mxu0 0
  %652 = vmatmul.mubr.bf16.gmra.mrb[0].mxu0 %v429
  %v653 = vpop.f32.mrb[0].mxu0
  %v654 = vadd.f32 0.0, %v653
  %v655 = vpop.f32.mrb[0].mxu0
  %v656 = vpop.f32.mrb[0].mxu0
  %v657 = vadd.f32 0.0, %v656
  %v658 = vpop.f32.mrb[0].mxu0
  %659 = vmatprep.mubr.bf16.mxu0 0
  %660 = vmatmul.mubr.bf16.gmra.mrb[0].mxu0 %v430
  %v661 = vpop.f32.mrb[0].mxu0
  %v662 = vadd.f32 0.0, %v661
  %v663 = vpop.f32.mrb[0].mxu0
  %v664 = vpop.f32.mrb[0].mxu0
  %v665 = vadd.f32 0.0, %v664
  %v666 = vpop.f32.mrb[0].mxu0
  %667 = vmatprep.mubr.bf16.mxu0 0
  %668 = vmatmul.mubr.bf16.gmra.mrb[0].mxu0 %v431
  %v669 = vpop.f32.mrb[0].mxu0
  %v670 = vadd.f32 0.0, %v669
  %v671 = vpop.f32.mrb[0].mxu0
  %v672 = vpop.f32.mrb[0].mxu0
  %v673 = vadd.f32 0.0, %v672
  %v674 = vpop.f32.mrb[0].mxu0
  %675 = vmatprep.mubr.bf16.mxu0 0
  %676 = vmatmul.mubr.bf16.gmra.mrb[0].mxu0 %v432
  %v677 = vpop.f32.mrb[0].mxu0
  %v678 = vadd.f32 0.0, %v677
  %v679 = vpop.f32.mrb[0].mxu0
  %v680 = vpop.f32.mrb[0].mxu0
  %v681 = vadd.f32 0.0, %v680
  %v682 = vpop.f32.mrb[0].mxu0
  %683 = vmatprep.mubr.bf16.mxu0 0
  %684 = vmatmul.mubr.bf16.gmra.mrb[0].mxu0 %v433
  %v685 = vpop.f32.mrb[0].mxu0
  %v686 = vadd.f32 0.0, %v685
  %v687 = vpop.f32.mrb[0].mxu0
  %v688 = vpop.f32.mrb[0].mxu0
  %v689 = vadd.f32 0.0, %v688
  %v690 = vpop.f32.mrb[0].mxu0
  %691 = vmatprep.mubr.bf16.mxu0 0
  %692 = vmatmul.mubr.bf16.gmra.mrb[0].mxu0 %v434
  %v693 = vpop.f32.mrb[0].mxu0
  %v694 = vadd.f32 0.0, %v693
  %v695 = vpop.f32.mrb[0].mxu0
  %v696 = vpop.f32.mrb[0].mxu0
  %v697 = vadd.f32 0.0, %v696
  %v698 = vpop.f32.mrb[0].mxu0
  %699 = vmatprep.mubr.bf16.mxu0 0
  %700 = vmatmul.mubr.bf16.gmra.mrb[0].mxu0 %v435
  %v701 = vpop.f32.mrb[0].mxu0
  %v702 = vadd.f32 0.0, %v701
  %v703 = vpop.f32.mrb[0].mxu0
  %v704 = vpop.f32.mrb[0].mxu0
  %v705 = vadd.f32 0.0, %v704
  %v706 = vpop.f32.mrb[0].mxu0
  %707 = vmatprep.mubr.bf16.mxu0 0
  %708 = vmatmul.mubr.bf16.gmra.mrb[0].mxu0 %v436
  %v709 = vpop.f32.mrb[0].mxu0
  %v710 = vadd.f32 0.0, %v709
  %v711 = vpop.f32.mrb[0].mxu0
  %v712 = vpop.f32.mrb[0].mxu0
  %v713 = vadd.f32 0.0, %v712
  %v714 = vpop.f32.mrb[0].mxu0
  %715 = vmatprep.mubr.bf16.mxu0 0
  %716 = vmatmul.mubr.bf16.gmra.mrb[0].mxu0 %v437
  %v717 = vpop.f32.mrb[0].mxu0
  %v718 = vadd.f32 0.0, %v717
  %v719 = vpop.f32.mrb[0].mxu0
  %v720 = vpop.f32.mrb[0].mxu0
  %v721 = vadd.f32 0.0, %v720
  %v722 = vpop.f32.mrb[0].mxu0
  %723 = vmatprep.mubr.bf16.mxu0 0
  %724 = vmatmul.mubr.bf16.gmra.mrb[0].mxu0 %v438
  %v725 = vpop.f32.mrb[0].mxu0
  %v726 = vadd.f32 0.0, %v725
  %v727 = vpop.f32.mrb[0].mxu0
  %v728 = vpop.f32.mrb[0].mxu0
  %v729 = vadd.f32 0.0, %v728
  %v730 = vpop.f32.mrb[0].mxu0
  %731 = vmatprep.mubr.bf16.mxu0 0
  %732 = vmatmul.mubr.bf16.gmra.mrb[0].mxu0 %v439
  %v733 = vpop.f32.mrb[0].mxu0
  %v734 = vadd.f32 0.0, %v733
  %v735 = vpop.f32.mrb[0].mxu0
  %v736 = vpop.f32.mrb[0].mxu0
  %v737 = vadd.f32 0.0, %v736
  %v738 = vpop.f32.mrb[0].mxu0
  %739 = vmatprep.mubr.bf16.mxu0 0
  %740 = vmatmul.mubr.bf16.gmra.mrb[0].mxu0 %v440
  %v741 = vpop.f32.mrb[0].mxu0
  %v742 = vadd.f32 0.0, %v741
  %v743 = vpop.f32.mrb[0].mxu0
  %v744 = vpop.f32.mrb[0].mxu0
  %v745 = vadd.f32 0.0, %v744
  %v746 = vpop.f32.mrb[0].mxu0
  %747 = vmatprep.mubr.bf16.mxu0 0
  %748 = vmatmul.mubr.bf16.gmra.mrb[0].mxu0 %v441
  %v749 = vpop.f32.mrb[0].mxu0
  %v750 = vadd.f32 0.0, %v749
  %v751 = vpop.f32.mrb[0].mxu0
  %v752 = vpop.f32.mrb[0].mxu0
  %v753 = vadd.f32 0.0, %v752
  %v754 = vpop.f32.mrb[0].mxu0
  %755 = vmatprep.mubr.bf16.mxu0 0
  %756 = vmatmul.mubr.bf16.gmra.mrb[0].mxu0 %v442
  %v757 = vpop.f32.mrb[0].mxu0
  %v758 = vadd.f32 0.0, %v757
  %v759 = vpop.f32.mrb[0].mxu0
  %v760 = vpop.f32.mrb[0].mxu0
  %v761 = vadd.f32 0.0, %v760
  %v762 = vpop.f32.mrb[0].mxu0
  %763 = vmatprep.mubr.bf16.mxu0 0
  %764 = vmatmul.mubr.bf16.gmra.mrb[0].mxu0 %v443
  %v765 = vpop.f32.mrb[0].mxu0
  %v766 = vadd.f32 0.0, %v765
  %v767 = vpop.f32.mrb[0].mxu0
  %v768 = vpop.f32.mrb[0].mxu0
  %v769 = vadd.f32 0.0, %v768
  %v770 = vpop.f32.mrb[0].mxu0
  %771 = vmatprep.mubr.bf16.mxu0 0
  %772 = vmatmul.mubr.bf16.gmra.mrb[0].mxu0 %v444
  %v773 = vpop.f32.mrb[0].mxu0
  %v774 = vadd.f32 0.0, %v773
  %v775 = vpop.f32.mrb[0].mxu0
  %v776 = vpop.f32.mrb[0].mxu0
  %v777 = vadd.f32 0.0, %v776
  %v778 = vpop.f32.mrb[0].mxu0
  %779 = vmatprep.mubr.bf16.mxu0 0
  %780 = vmatmul.mubr.bf16.gmra.mrb[0].mxu0 %v445
  %v781 = vpop.f32.mrb[0].mxu0
  %v782 = vadd.f32 0.0, %v781
  %v783 = vpop.f32.mrb[0].mxu0
  %v784 = vpop.f32.mrb[0].mxu0
  %v785 = vadd.f32 0.0, %v784
  %v786 = vpop.f32.mrb[0].mxu0
  %787 = vmatprep.mubr.bf16.mxu0 0
  %788 = vmatmul.mubr.bf16.gmra.mrb[0].mxu0 %v446
  %v789 = vpop.f32.mrb[0].mxu0
  %v790 = vadd.f32 0.0, %v789
  %v791 = vpop.f32.mrb[0].mxu0
  %v792 = vpop.f32.mrb[0].mxu0
  %v793 = vadd.f32 0.0, %v792
  %v794 = vpop.f32.mrb[0].mxu0
  %795 = vmatprep.mubr.bf16.mxu0 0
  %796 = vmatmul.mubr.bf16.gmra.mrb[0].mxu0 %v447
  %v797 = vpop.f32.mrb[0].mxu0
  %v798 = vadd.f32 0.0, %v797
  %v799 = vpop.f32.mrb[0].mxu0
  %v800 = vpop.f32.mrb[0].mxu0
  %v801 = vadd.f32 0.0, %v800
  %v802 = vpop.f32.mrb[0].mxu0
  %803 = vmatprep.mubr.bf16.mxu0 0
  %804 = vmatmul.mubr.bf16.gmra.mrb[0].mxu0 %v448
  %v805 = vpop.f32.mrb[0].mxu0
  %v806 = vadd.f32 0.0, %v805
  %v807 = vpop.f32.mrb[0].mxu0
  %v808 = vpop.f32.mrb[0].mxu0
  %v809 = vadd.f32 0.0, %v808
  %v810 = vpop.f32.mrb[0].mxu0
  %811 = vmatprep.mubr.bf16.mxu0 0
  %812 = vmatmul.mubr.bf16.gmra.mrb[0].mxu0 %v449
  %v813 = vpop.f32.mrb[0].mxu0
  %v814 = vadd.f32 0.0, %v813
  %v815 = vpop.f32.mrb[0].mxu0
  %v816 = vpop.f32.mrb[0].mxu0
  %v817 = vadd.f32 0.0, %v816
  %v818 = vpop.f32.mrb[0].mxu0
  %819 = vmatprep.mubr.bf16.mxu0 0
  %820 = vmatmul.mubr.bf16.gmra.mrb[0].mxu0 %v450
  %v821 = vpop.f32.mrb[0].mxu0
  %v822 = vadd.f32 0.0, %v821
  %v823 = vpop.f32.mrb[0].mxu0
  %v824 = vpop.f32.mrb[0].mxu0
  %v825 = vadd.f32 0.0, %v824
  %v826 = vpop.f32.mrb[0].mxu0
  %827 = vmatprep.mubr.bf16.mxu0 0
  %828 = vmatmul.mubr.bf16.gmra.mrb[0].mxu0 %v451
  %v829 = vpop.f32.mrb[0].mxu0
  %v830 = vadd.f32 0.0, %v829
  %v831 = vpop.f32.mrb[0].mxu0
  %v832 = vpop.f32.mrb[0].mxu0
  %v833 = vadd.f32 0.0, %v832
  %v834 = vpop.f32.mrb[0].mxu0
  %835 = vmatprep.mubr.bf16.mxu0 0
  %836 = vmatmul.mubr.bf16.gmra.mrb[0].mxu0 %v452
  %v837 = vpop.f32.mrb[0].mxu0
  %v838 = vadd.f32 0.0, %v837
  %v839 = vpop.f32.mrb[0].mxu0
  %v840 = vpop.f32.mrb[0].mxu0
  %v841 = vadd.f32 0.0, %v840
  %v842 = vpop.f32.mrb[0].mxu0
  %843 = vmatprep.mubr.bf16.mxu0 0
  %844 = vmatmul.mubr.bf16.gmra.mrb[0].mxu0 %v453
  %v845 = vpop.f32.mrb[0].mxu0
  %v846 = vadd.f32 0.0, %v845
  %v847 = vpop.f32.mrb[0].mxu0
  %v848 = vpop.f32.mrb[0].mxu0
  %v849 = vadd.f32 0.0, %v848
  %v850 = vpop.f32.mrb[0].mxu0
  %851 = vmatprep.mubr.bf16.mxu0 0
  %852 = vmatmul.mubr.bf16.gmra.mrb[0].mxu0 %v454
  %v853 = vpop.f32.mrb[0].mxu0
  %v854 = vadd.f32 0.0, %v853
  %v855 = vpop.f32.mrb[0].mxu0
  %v856 = vpop.f32.mrb[0].mxu0
  %v857 = vadd.f32 0.0, %v856
  %v858 = vpop.f32.mrb[0].mxu0
  %859 = vmatprep.mubr.bf16.mxu0 0
  %860 = vmatmul.mubr.bf16.gmra.mrb[0].mxu0 %v455
  %v861 = vpop.f32.mrb[0].mxu0
  %v862 = vadd.f32 0.0, %v861
  %v863 = vpop.f32.mrb[0].mxu0
  %v864 = vpop.f32.mrb[0].mxu0
  %v865 = vadd.f32 0.0, %v864
  %v866 = vpop.f32.mrb[0].mxu0
  %867 = vmatprep.mubr.bf16.mxu0 0
  %868 = vmatmul.mubr.bf16.gmra.mrb[0].mxu0 %v456
  %v869 = vpop.f32.mrb[0].mxu0
  %v870 = vadd.f32 0.0, %v869
  %v871 = vpop.f32.mrb[0].mxu0
  %v872 = vpop.f32.mrb[0].mxu0
  %v873 = vadd.f32 0.0, %v872
  %v874 = vpop.f32.mrb[0].mxu0
  %875 = vmatprep.mubr.bf16.mxu0 0
  %876 = vmatmul.mubr.bf16.gmra.mrb[0].mxu0 %v457
  %v877 = vpop.f32.mrb[0].mxu0
  %v878 = vadd.f32 0.0, %v877
  %v879 = vpop.f32.mrb[0].mxu0
  %v880 = vpop.f32.mrb[0].mxu0
  %v881 = vadd.f32 0.0, %v880
  %v882 = vpop.f32.mrb[0].mxu0
  %883 = vmatprep.mubr.bf16.mxu0 0
  %884 = vmatmul.mubr.bf16.gmra.mrb[0].mxu0 %v458
  %v885 = vpop.f32.mrb[0].mxu0
  %v886 = vadd.f32 0.0, %v885
  %v887 = vpop.f32.mrb[0].mxu0
  %v888 = vpop.f32.mrb[0].mxu0
  %v889 = vadd.f32 0.0, %v888
  %v890 = vpop.f32.mrb[0].mxu0
  %891 = vmatprep.mubr.bf16.mxu0 0
  %892 = vmatmul.mubr.bf16.gmra.mrb[0].mxu0 %v459
  %v893 = vpop.f32.mrb[0].mxu0
  %v894 = vadd.f32 0.0, %v893
  %v895 = vpop.f32.mrb[0].mxu0
  %v896 = vpop.f32.mrb[0].mxu0
  %v897 = vadd.f32 0.0, %v896
  %v898 = vpop.f32.mrb[0].mxu0
  %899 = vmatprep.mubr.bf16.mxu0 0
  %900 = vmatmul.mubr.bf16.gmra.mrb[0].mxu0 %v460
  %v901 = vpop.f32.mrb[0].mxu0
  %v902 = vadd.f32 0.0, %v901
  %v903 = vpop.f32.mrb[0].mxu0
  %v904 = vpop.f32.mrb[0].mxu0
  %v905 = vadd.f32 0.0, %v904
  %v906 = vpop.f32.mrb[0].mxu0
  %907 = vmatprep.mubr.bf16.mxu0 0
  %908 = vmatmul.mubr.bf16.gmra.mrb[0].mxu0 %v461
  %v909 = vpop.f32.mrb[0].mxu0
  %v910 = vadd.f32 0.0, %v909
  %v911 = vpop.f32.mrb[0].mxu0
  %v912 = vpop.f32.mrb[0].mxu0
  %v913 = vadd.f32 0.0, %v912
  %v914 = vpop.f32.mrb[0].mxu0
  %915 = vmatprep.mubr.bf16.mxu0 0
  %916 = vmatmul.mubr.bf16.gmra.mrb[0].mxu0 %v462
  %v917 = vpop.f32.mrb[0].mxu0
  %v918 = vadd.f32 0.0, %v917
  %v919 = vpop.f32.mrb[0].mxu0
  %v920 = vpop.f32.mrb[0].mxu0
  %v921 = vadd.f32 0.0, %v920
  %v922 = vpop.f32.mrb[0].mxu0
  %923 = vmatprep.mubr.bf16.mxu0 0
  %924 = vmatmul.mubr.bf16.gmra.mrb[0].mxu0 %v463
  %v925 = vpop.f32.mrb[0].mxu0
  %v926 = vadd.f32 0.0, %v925
  %v927 = vpop.f32.mrb[0].mxu0
  %v928 = vpop.f32.mrb[0].mxu0
  %v929 = vadd.f32 0.0, %v928
  %v930 = vpop.f32.mrb[0].mxu0
  %931 = vmatprep.mubr.bf16.mxu0 0
  %932 = vmatmul.mubr.bf16.gmra.mrb[0].mxu0 %v464
  %v933 = vpop.f32.mrb[0].mxu0
  %v934 = vadd.f32 0.0, %v933
  %v935 = vpop.f32.mrb[0].mxu0
  %v936 = vpop.f32.mrb[0].mxu0
  %v937 = vadd.f32 0.0, %v936
  %v938 = vpop.f32.mrb[0].mxu0
  %939 = vmatprep.mubr.bf16.mxu0 0
  %940 = vmatmul.mubr.bf16.gmra.mrb[0].mxu0 %v465
  %v941 = vpop.f32.mrb[0].mxu0
  %v942 = vadd.f32 0.0, %v941
  %v943 = vpop.f32.mrb[0].mxu0
  %v944 = vpop.f32.mrb[0].mxu0
  %v945 = vadd.f32 0.0, %v944
  %v946 = vpop.f32.mrb[0].mxu0
  %947 = vmatprep.mubr.bf16.mxu0 0
  %948 = vmatmul.mubr.bf16.gmra.mrb[0].mxu0 %v466
  %v949 = vpop.f32.mrb[0].mxu0
  %v950 = vadd.f32 0.0, %v949
  %v951 = vpop.f32.mrb[0].mxu0
  %v952 = vpop.f32.mrb[0].mxu0
  %v953 = vadd.f32 0.0, %v952
  %v954 = vpop.f32.mrb[0].mxu0
  %955 = vmatprep.mubr.bf16.mxu0 0
  %956 = vmatmul.mubr.bf16.gmra.mrb[0].mxu0 %v467
  %v957 = vpop.f32.mrb[0].mxu0
  %v958 = vadd.f32 0.0, %v957
  %v959 = vpop.f32.mrb[0].mxu0
  %v960 = vpop.f32.mrb[0].mxu0
  %v961 = vadd.f32 0.0, %v960
  %v962 = vpop.f32.mrb[0].mxu0
  %963 = vmatprep.mubr.bf16.mxu0 0
  %964 = vmatmul.mubr.bf16.gmra.mrb[0].mxu0 %v468
  %v965 = vpop.f32.mrb[0].mxu0
  %v966 = vadd.f32 0.0, %v965
  %v967 = vpop.f32.mrb[0].mxu0
  %v968 = vpop.f32.mrb[0].mxu0
  %v969 = vadd.f32 0.0, %v968
  %v970 = vpop.f32.mrb[0].mxu0
  %971 = vmatprep.mubr.bf16.mxu0 0
  %972 = vmatmul.mubr.bf16.gmra.mrb[0].mxu0 %v469
  %v973 = vpop.f32.mrb[0].mxu0
  %v974 = vadd.f32 0.0, %v973
  %v975 = vpop.f32.mrb[0].mxu0
  %v976 = vpop.f32.mrb[0].mxu0
  %v977 = vadd.f32 0.0, %v976
  %v978 = vpop.f32.mrb[0].mxu0
  %979 = vmatprep.mubr.bf16.mxu0 0
  %980 = vmatmul.mubr.bf16.gmra.mrb[0].mxu0 %v470
  %v981 = vpop.f32.mrb[0].mxu0
  %v982 = vadd.f32 0.0, %v981
  %v983 = vpop.f32.mrb[0].mxu0
  %v984 = vpop.f32.mrb[0].mxu0
  %v985 = vadd.f32 0.0, %v984
  %v986 = vpop.f32.mrb[0].mxu0
  %987 = vmatprep.mubr.bf16.mxu0 0
  %988 = vmatmul.mubr.bf16.gmra.mrb[0].mxu0 %v471
  %v989 = vpop.f32.mrb[0].mxu0
  %v990 = vadd.f32 0.0, %v989
  %v991 = vpop.f32.mrb[0].mxu0
  %v992 = vpop.f32.mrb[0].mxu0
  %v993 = vadd.f32 0.0, %v992
  %v994 = vpop.f32.mrb[0].mxu0
  %995 = vmatprep.mubr.bf16.mxu0 0
  %996 = vmatmul.mubr.bf16.gmra.mrb[0].mxu0 %v472
  %v997 = vpop.f32.mrb[0].mxu0
  %v998 = vadd.f32 0.0, %v997
  %v999 = vpop.f32.mrb[0].mxu0
  %v1000 = vpop.f32.mrb[0].mxu0
  %v1001 = vadd.f32 0.0, %v1000
  %v1002 = vpop.f32.mrb[0].mxu0
  %1003 = vmatprep.mubr.bf16.mxu0 0
  %1004 = vmatmul.mubr.bf16.gmra.mrb[0].mxu0 %v473
  %v1005 = vpop.f32.mrb[0].mxu0
  %v1006 = vadd.f32 0.0, %v1005
  %v1007 = vpop.f32.mrb[0].mxu0
  %v1008 = vpop.f32.mrb[0].mxu0
  %v1009 = vadd.f32 0.0, %v1008
  %v1010 = vpop.f32.mrb[0].mxu0
  %1011 = vmatprep.mubr.bf16.mxu0 0
  %1012 = vmatmul.mubr.bf16.gmra.mrb[0].mxu0 %v474
  %v1013 = vpop.f32.mrb[0].mxu0
  %v1014 = vadd.f32 0.0, %v1013
  %v1015 = vpop.f32.mrb[0].mxu0
  %v1016 = vpop.f32.mrb[0].mxu0
  %v1017 = vadd.f32 0.0, %v1016
  %v1018 = vpop.f32.mrb[0].mxu0
  %1019 = vmatprep.mubr.bf16.mxu0 0
  %1020 = vmatmul.mubr.bf16.gmra.mrb[0].mxu0 %v475
  %v1021 = vpop.f32.mrb[0].mxu0
  %v1022 = vadd.f32 0.0, %v1021
  %v1023 = vpop.f32.mrb[0].mxu0
  %v1024 = vpop.f32.mrb[0].mxu0
  %v1025 = vadd.f32 0.0, %v1024
  %v1026 = vpop.f32.mrb[0].mxu0
  %1027 = vmatprep.mubr.bf16.mxu0 0
  %1028 = vmatmul.mubr.bf16.gmra.mrb[0].mxu0 %v476
  %v1029 = vpop.f32.mrb[0].mxu0
  %v1030 = vadd.f32 0.0, %v1029
  %v1031 = vpop.f32.mrb[0].mxu0
  %v1032 = vpop.f32.mrb[0].mxu0
  %v1033 = vadd.f32 0.0, %v1032
  %v1034 = vpop.f32.mrb[0].mxu0
  %1035 = vmatprep.mubr.bf16.mxu0 0
  %1036 = vmatmul.mubr.bf16.gmra.mrb[0].mxu0 %v477
  %v1037 = vpop.f32.mrb[0].mxu0
  %v1038 = vadd.f32 0.0, %v1037
  %v1039 = vpop.f32.mrb[0].mxu0
  %v1040 = vpop.f32.mrb[0].mxu0
  %v1041 = vadd.f32 0.0, %v1040
  %v1042 = vpop.f32.mrb[0].mxu0
  %1043 = vmatprep.mubr.bf16.mxu0 0
  %1044 = vmatmul.mubr.bf16.gmra.mrb[0].mxu0 %v478
  %v1045 = vpop.f32.mrb[0].mxu0
  %v1046 = vadd.f32 0.0, %v1045
  %v1047 = vpop.f32.mrb[0].mxu0
  %v1048 = vpop.f32.mrb[0].mxu0
  %v1049 = vadd.f32 0.0, %v1048
  %v1050 = vpop.f32.mrb[0].mxu0
  %1051 = vmatprep.mubr.bf16.mxu0 0
  %1052 = vmatmul.mubr.bf16.gmra.mrb[0].mxu0 %v479
  %v1053 = vpop.f32.mrb[0].mxu0
  %v1054 = vadd.f32 0.0, %v1053
  %v1055 = vpop.f32.mrb[0].mxu0
  %v1056 = vpop.f32.mrb[0].mxu0
  %v1057 = vadd.f32 0.0, %v1056
  %v1058 = vpop.f32.mrb[0].mxu0
  %1059 = vmatprep.mubr.bf16.mxu0 0
  %1060 = vmatmul.mubr.bf16.gmra.mrb[0].mxu0 %v480
  %v1061 = vpop.f32.mrb[0].mxu0
  %v1062 = vadd.f32 0.0, %v1061
  %v1063 = vpop.f32.mrb[0].mxu0
  %v1064 = vpop.f32.mrb[0].mxu0
  %v1065 = vadd.f32 0.0, %v1064
  %v1066 = vpop.f32.mrb[0].mxu0
  %1067 = vmatprep.mubr.bf16.mxu0 0
  %1068 = vmatmul.mubr.bf16.gmra.mrb[0].mxu0 %v481
  %v1069 = vpop.f32.mrb[0].mxu0
  %v1070 = vadd.f32 0.0, %v1069
  %v1071 = vpop.f32.mrb[0].mxu0
  %v1072 = vpop.f32.mrb[0].mxu0
  %v1073 = vadd.f32 0.0, %v1072
  %v1074 = vpop.f32.mrb[0].mxu0
  %1075 = vmatprep.mubr.bf16.mxu0 0
  %1076 = vmatmul.mubr.bf16.gmra.mrb[0].mxu0 %v482
  %v1077 = vpop.f32.mrb[0].mxu0
  %v1078 = vadd.f32 0.0, %v1077
  %v1079 = vpop.f32.mrb[0].mxu0
  %v1080 = vpop.f32.mrb[0].mxu0
  %v1081 = vadd.f32 0.0, %v1080
  %v1082 = vpop.f32.mrb[0].mxu0
  %1083 = vmatprep.mubr.bf16.mxu0 0
  %1084 = vmatmul.mubr.bf16.gmra.mrb[0].mxu0 %v483
  %v1085 = vpop.f32.mrb[0].mxu0
  %v1086 = vadd.f32 0.0, %v1085
  %v1087 = vpop.f32.mrb[0].mxu0
  %v1088 = vpop.f32.mrb[0].mxu0
  %v1089 = vadd.f32 0.0, %v1088
  %v1090 = vpop.f32.mrb[0].mxu0
  %1091 = vmatprep.mubr.bf16.mxu0 0
  %1092 = vmatmul.mubr.bf16.gmra.mrb[0].mxu0 %v484
  %v1093 = vpop.f32.mrb[0].mxu0
  %v1094 = vadd.f32 0.0, %v1093
  %v1095 = vpop.f32.mrb[0].mxu0
  %v1096 = vpop.f32.mrb[0].mxu0
  %v1097 = vadd.f32 0.0, %v1096
  %v1098 = vpop.f32.mrb[0].mxu0
  %1099 = vmatprep.mubr.bf16.mxu0 0
  %1100 = vmatmul.mubr.bf16.gmra.mrb[0].mxu0 %v485
  %v1101 = vpop.f32.mrb[0].mxu0
  %v1102 = vadd.f32 0.0, %v1101
  %v1103 = vpop.f32.mrb[0].mxu0
  %v1104 = vpop.f32.mrb[0].mxu0
  %v1105 = vadd.f32 0.0, %v1104
  %v1106 = vpop.f32.mrb[0].mxu0
  %1107 = vmatprep.mubr.bf16.mxu0 0
  %1108 = vmatmul.mubr.bf16.gmra.mrb[0].mxu0 %v486
  %v1109 = vpop.f32.mrb[0].mxu0
  %v1110 = vadd.f32 0.0, %v1109
  %v1111 = vpop.f32.mrb[0].mxu0
  %v1112 = vpop.f32.mrb[0].mxu0
  %v1113 = vadd.f32 0.0, %v1112
  %v1114 = vpop.f32.mrb[0].mxu0
  %1115 = vmatprep.mubr.bf16.mxu0 0
  %1116 = vmatmul.mubr.bf16.gmra.mrb[0].mxu0 %v487
  %v1117 = vpop.f32.mrb[0].mxu0
  %v1118 = vadd.f32 0.0, %v1117
  %v1119 = vpop.f32.mrb[0].mxu0
  %v1120 = vpop.f32.mrb[0].mxu0
  %v1121 = vadd.f32 0.0, %v1120
  %v1122 = vpop.f32.mrb[0].mxu0
  %1123 = vmatprep.mubr.bf16.mxu0 0
  %1124 = vmatmul.mubr.bf16.gmra.mrb[0].mxu0 %v488
  %v1125 = vpop.f32.mrb[0].mxu0
  %v1126 = vadd.f32 0.0, %v1125
  %v1127 = vpop.f32.mrb[0].mxu0
  %v1128 = vpop.f32.mrb[0].mxu0
  %v1129 = vadd.f32 0.0, %v1128
  %v1130 = vpop.f32.mrb[0].mxu0
  %1131 = vmatprep.mubr.bf16.mxu0 0
  %1132 = vmatmul.mubr.bf16.gmra.mrb[0].mxu0 %v489
  %v1133 = vpop.f32.mrb[0].mxu0
  %v1134 = vadd.f32 0.0, %v1133
  %v1135 = vpop.f32.mrb[0].mxu0
  %v1136 = vpop.f32.mrb[0].mxu0
  %v1137 = vadd.f32 0.0, %v1136
  %v1138 = vpop.f32.mrb[0].mxu0
  %1139 = vmatprep.mubr.bf16.mxu0 0
  %1140 = vmatmul.mubr.bf16.gmra.mrb[0].mxu0 %v490
  %v1141 = vpop.f32.mrb[0].mxu0
  %v1142 = vadd.f32 0.0, %v1141
  %v1143 = vpop.f32.mrb[0].mxu0
  %v1144 = vpop.f32.mrb[0].mxu0
  %v1145 = vadd.f32 0.0, %v1144
  %v1146 = vpop.f32.mrb[0].mxu0
  %1147 = vdwg.mxu0
  %v1148 = vtanh.pop %v638
  %v1149 = vtanh.pop %v641
  %v1150 = vtanh.pop %v646
  %v1151 = vtanh.pop %v649
  %v1152 = vtanh.pop %v654
  %v1153 = vtanh.pop %v657
  %v1154 = vtanh.pop %v662
  %v1155 = vtanh.pop %v665
  %v1156 = vtanh.pop %v670
  %v1157 = vtanh.pop %v673
  %v1158 = vtanh.pop %v678
  %v1159 = vtanh.pop %v681
  %v1160 = vtanh.pop %v686
  %v1161 = vtanh.pop %v689
  %v1162 = vtanh.pop %v694
  %v1163 = vtanh.pop %v697
  %v1164 = vtanh.pop %v702
  %v1165 = vtanh.pop %v705
  %v1166 = vtanh.pop %v710
  %v1167 = vtanh.pop %v713
  %v1168 = vtanh.pop %v718
  %v1169 = vtanh.pop %v721
  %v1170 = vtanh.pop %v726
  %v1171 = vtanh.pop %v729
  %v1172 = vtanh.pop %v734
  %v1173 = vtanh.pop %v737
  %v1174 = vtanh.pop %v742
  %v1175 = vtanh.pop %v745
  %v1176 = vtanh.pop %v750
  %v1177 = vtanh.pop %v753
  %v1178 = vtanh.pop %v758
  %v1179 = vtanh.pop %v761
  %v1180 = vtanh.pop %v766
  %v1181 = vtanh.pop %v769
  %v1182 = vtanh.pop %v774
  %v1183 = vtanh.pop %v777
  %v1184 = vtanh.pop %v782
  %v1185 = vtanh.pop %v785
  %v1186 = vtanh.pop %v790
  %v1187 = vtanh.pop %v793
  %v1188 = vtanh.pop %v798
  %v1189 = vtanh.pop %v801
  %v1190 = vtanh.pop %v806
  %v1191 = vtanh.pop %v809
  %v1192 = vtanh.pop %v814
  %v1193 = vtanh.pop %v817
  %v1194 = vtanh.pop %v822
  %v1195 = vtanh.pop %v825
  %v1196 = vtanh.pop %v830
  %v1197 = vtanh.pop %v833
  %v1198 = vtanh.pop %v838
  %v1199 = vtanh.pop %v841
  %v1200 = vtanh.pop %v846
  %v1201 = vtanh.pop %v849
  %v1202 = vtanh.pop %v854
  %v1203 = vtanh.pop %v857
  %v1204 = vtanh.pop %v862
  %v1205 = vtanh.pop %v865
  %v1206 = vtanh.pop %v870
  %v1207 = vtanh.pop %v873
  %v1208 = vtanh.pop %v878
  %v1209 = vtanh.pop %v881
  %v1210 = vtanh.pop %v886
  %v1211 = vtanh.pop %v889
  %v1212 = vtanh.pop %v894
  %v1213 = vtanh.pop %v897
  %v1214 = vtanh.pop %v902
  %v1215 = vtanh.pop %v905
  %v1216 = vtanh.pop %v910
  %v1217 = vtanh.pop %v913
  %v1218 = vtanh.pop %v918
  %v1219 = vtanh.pop %v921
  %v1220 = vtanh.pop %v926
  %v1221 = vtanh.pop %v929
  %v1222 = vtanh.pop %v934
  %v1223 = vtanh.pop %v937
  %v1224 = vtanh.pop %v942
  %v1225 = vtanh.pop %v945
  %v1226 = vtanh.pop %v950
  %v1227 = vtanh.pop %v953
  %v1228 = vtanh.pop %v958
  %v1229 = vtanh.pop %v961
  %v1230 = vtanh.pop %v966
  %v1231 = vtanh.pop %v969
  %v1232 = vtanh.pop %v974
  %v1233 = vtanh.pop %v977
  %v1234 = vtanh.pop %v982
  %v1235 = vtanh.pop %v985
  %v1236 = vtanh.pop %v990
  %v1237 = vtanh.pop %v993
  %v1238 = vtanh.pop %v998
  %v1239 = vtanh.pop %v1001
  %v1240 = vtanh.pop %v1006
  %v1241 = vtanh.pop %v1009
  %v1242 = vtanh.pop %v1014
  %v1243 = vtanh.pop %v1017
  %v1244 = vtanh.pop %v1022
  %v1245 = vtanh.pop %v1025
  %v1246 = vtanh.pop %v1030
  %v1247 = vtanh.pop %v1033
  %v1248 = vtanh.pop %v1038
  %v1249 = vtanh.pop %v1041
  %v1250 = vtanh.pop %v1046
  %v1251 = vtanh.pop %v1049
  %v1252 = vtanh.pop %v1054
  %v1253 = vtanh.pop %v1057
  %v1254 = vtanh.pop %v1062
  %v1255 = vtanh.pop %v1065
  %v1256 = vtanh.pop %v1070
  %v1257 = vtanh.pop %v1073
  %v1258 = vtanh.pop %v1078
  %v1259 = vtanh.pop %v1081
  %v1260 = vtanh.pop %v1086
  %v1261 = vtanh.pop %v1089
  %v1262 = vtanh.pop %v1094
  %v1263 = vtanh.pop %v1097
  %v1264 = vtanh.pop %v1102
  %v1265 = vtanh.pop %v1105
  %v1266 = vtanh.pop %v1110
  %v1267 = vtanh.pop %v1113
  %v1268 = vtanh.pop %v1118
  %v1269 = vtanh.pop %v1121
  %v1270 = vtanh.pop %v1126
  %v1271 = vtanh.pop %v1129
  %v1272 = vtanh.pop %v1134
  %v1273 = vtanh.pop %v1137
  %v1274 = vtanh.pop %v1142
  %v1275 = vtanh.pop %v1145
  %v1276 = vld [vmem:[%s3] sm:$0x1]
  %v1278 = vlaneseq
  %v1279 = vshrl.u32 %v1278, 7
  %v1280 = vsub.s32 0, %v1279
  %v1281 = vrot.slane %v1276, %v1280
  %v1283 = vmul.f32 %v1148, %v1281
  %v1284 = vmul.f32 %v1149, %v1281
  %v1285 = vmul.f32 %v1150, %v1281
  %v1286 = vmul.f32 %v1151, %v1281
  %v1287 = vmul.f32 %v1152, %v1281
  %v1288 = vmul.f32 %v1153, %v1281
  %v1289 = vmul.f32 %v1154, %v1281
  %v1290 = vmul.f32 %v1155, %v1281
  %v1291 = vmul.f32 %v1156, %v1281
  %v1292 = vmul.f32 %v1157, %v1281
  %v1293 = vmul.f32 %v1158, %v1281
  %v1294 = vmul.f32 %v1159, %v1281
  %v1295 = vmul.f32 %v1160, %v1281
  %v1296 = vmul.f32 %v1161, %v1281
  %v1297 = vmul.f32 %v1162, %v1281
  %v1298 = vmul.f32 %v1163, %v1281
  %v1299 = vmul.f32 %v1164, %v1281
  %v1300 = vmul.f32 %v1165, %v1281
  %v1301 = vmul.f32 %v1166, %v1281
  %v1302 = vmul.f32 %v1167, %v1281
  %v1303 = vmul.f32 %v1168, %v1281
  %v1304 = vmul.f32 %v1169, %v1281
  %v1305 = vmul.f32 %v1170, %v1281
  %v1306 = vmul.f32 %v1171, %v1281
  %v1307 = vmul.f32 %v1172, %v1281
  %v1308 = vmul.f32 %v1173, %v1281
  %v1309 = vmul.f32 %v1174, %v1281
  %v1310 = vmul.f32 %v1175, %v1281
  %v1311 = vmul.f32 %v1176, %v1281
  %v1312 = vmul.f32 %v1177, %v1281
  %v1313 = vmul.f32 %v1178, %v1281
  %v1314 = vmul.f32 %v1179, %v1281
  %v1315 = vmul.f32 %v1180, %v1281
  %v1316 = vmul.f32 %v1181, %v1281
  %v1317 = vmul.f32 %v1182, %v1281
  %v1318 = vmul.f32 %v1183, %v1281
  %v1319 = vmul.f32 %v1184, %v1281
  %v1320 = vmul.f32 %v1185, %v1281
  %v1321 = vmul.f32 %v1186, %v1281
  %v1322 = vmul.f32 %v1187, %v1281
  %v1323 = vmul.f32 %v1188, %v1281
  %v1324 = vmul.f32 %v1189, %v1281
  %v1325 = vmul.f32 %v1190, %v1281
  %v1326 = vmul.f32 %v1191, %v1281
  %v1327 = vmul.f32 %v1192, %v1281
  %v1328 = vmul.f32 %v1193, %v1281
  %v1329 = vmul.f32 %v1194, %v1281
  %v1330 = vmul.f32 %v1195, %v1281
  %v1331 = vmul.f32 %v1196, %v1281
  %v1332 = vmul.f32 %v1197, %v1281
  %v1333 = vmul.f32 %v1198, %v1281
  %v1334 = vmul.f32 %v1199, %v1281
  %v1335 = vmul.f32 %v1200, %v1281
  %v1336 = vmul.f32 %v1201, %v1281
  %v1337 = vmul.f32 %v1202, %v1281
  %v1338 = vmul.f32 %v1203, %v1281
  %v1339 = vmul.f32 %v1204, %v1281
  %v1340 = vmul.f32 %v1205, %v1281
  %v1341 = vmul.f32 %v1206, %v1281
  %v1342 = vmul.f32 %v1207, %v1281
  %v1343 = vmul.f32 %v1208, %v1281
  %v1344 = vmul.f32 %v1209, %v1281
  %v1345 = vmul.f32 %v1210, %v1281
  %v1346 = vmul.f32 %v1211, %v1281
  %v1347 = vmul.f32 %v1212, %v1281
  %v1348 = vmul.f32 %v1213, %v1281
  %v1349 = vmul.f32 %v1214, %v1281
  %v1350 = vmul.f32 %v1215, %v1281
  %v1351 = vmul.f32 %v1216, %v1281
  %v1352 = vmul.f32 %v1217, %v1281
  %v1353 = vmul.f32 %v1218, %v1281
  %v1354 = vmul.f32 %v1219, %v1281
  %v1355 = vmul.f32 %v1220, %v1281
  %v1356 = vmul.f32 %v1221, %v1281
  %v1357 = vmul.f32 %v1222, %v1281
  %v1358 = vmul.f32 %v1223, %v1281
  %v1359 = vmul.f32 %v1224, %v1281
  %v1360 = vmul.f32 %v1225, %v1281
  %v1361 = vmul.f32 %v1226, %v1281
  %v1362 = vmul.f32 %v1227, %v1281
  %v1363 = vmul.f32 %v1228, %v1281
  %v1364 = vmul.f32 %v1229, %v1281
  %v1365 = vmul.f32 %v1230, %v1281
  %v1366 = vmul.f32 %v1231, %v1281
  %v1367 = vmul.f32 %v1232, %v1281
  %v1368 = vmul.f32 %v1233, %v1281
  %v1369 = vmul.f32 %v1234, %v1281
  %v1370 = vmul.f32 %v1235, %v1281
  %v1371 = vmul.f32 %v1236, %v1281
  %v1372 = vmul.f32 %v1237, %v1281
  %v1373 = vmul.f32 %v1238, %v1281
  %v1374 = vmul.f32 %v1239, %v1281
  %v1375 = vmul.f32 %v1240, %v1281
  %v1376 = vmul.f32 %v1241, %v1281
  %v1377 = vmul.f32 %v1242, %v1281
  %v1378 = vmul.f32 %v1243, %v1281
  %v1379 = vmul.f32 %v1244, %v1281
  %v1380 = vmul.f32 %v1245, %v1281
  %v1381 = vmul.f32 %v1246, %v1281
  %v1382 = vmul.f32 %v1247, %v1281
  %v1383 = vmul.f32 %v1248, %v1281
  %v1384 = vmul.f32 %v1249, %v1281
  %v1385 = vmul.f32 %v1250, %v1281
  %v1386 = vmul.f32 %v1251, %v1281
  %v1387 = vmul.f32 %v1252, %v1281
  %v1388 = vmul.f32 %v1253, %v1281
  %v1389 = vmul.f32 %v1254, %v1281
  %v1390 = vmul.f32 %v1255, %v1281
  %v1391 = vmul.f32 %v1256, %v1281
  %v1392 = vmul.f32 %v1257, %v1281
  %v1393 = vmul.f32 %v1258, %v1281
  %v1394 = vmul.f32 %v1259, %v1281
  %v1395 = vmul.f32 %v1260, %v1281
  %v1396 = vmul.f32 %v1261, %v1281
  %v1397 = vmul.f32 %v1262, %v1281
  %v1398 = vmul.f32 %v1263, %v1281
  %v1399 = vmul.f32 %v1264, %v1281
  %v1400 = vmul.f32 %v1265, %v1281
  %v1401 = vmul.f32 %v1266, %v1281
  %v1402 = vmul.f32 %v1267, %v1281
  %v1403 = vmul.f32 %v1268, %v1281
  %v1404 = vmul.f32 %v1269, %v1281
  %v1405 = vmul.f32 %v1270, %v1281
  %v1406 = vmul.f32 %v1271, %v1281
  %v1407 = vmul.f32 %v1272, %v1281
  %v1408 = vmul.f32 %v1273, %v1281
  %v1409 = vmul.f32 %v1274, %v1281
  %v1410 = vmul.f32 %v1275, %v1281
  %1411 = vadd.xlane.f32.xlu0 %v1283
  %v1412 = vpop.xlane.xlu0 %1411
  %1413 = vadd.xlane.f32.xlu0 %v1284
  %v1414 = vpop.xlane.xlu0 %1413
  %1415 = vadd.xlane.f32.xlu0 %v1285
  %v1416 = vpop.xlane.xlu0 %1415
  %1417 = vadd.xlane.f32.xlu0 %v1286
  %v1418 = vpop.xlane.xlu0 %1417
  %1419 = vadd.xlane.f32.xlu0 %v1287
  %v1420 = vpop.xlane.xlu0 %1419
  %1421 = vadd.xlane.f32.xlu0 %v1288
  %v1422 = vpop.xlane.xlu0 %1421
  %1423 = vadd.xlane.f32.xlu0 %v1289
  %v1424 = vpop.xlane.xlu0 %1423
  %1425 = vadd.xlane.f32.xlu0 %v1290
  %v1426 = vpop.xlane.xlu0 %1425
  %1427 = vadd.xlane.f32.xlu0 %v1291
  %v1428 = vpop.xlane.xlu0 %1427
  %1429 = vadd.xlane.f32.xlu0 %v1292
  %v1430 = vpop.xlane.xlu0 %1429
  %1431 = vadd.xlane.f32.xlu0 %v1293
  %v1432 = vpop.xlane.xlu0 %1431
  %1433 = vadd.xlane.f32.xlu0 %v1294
  %v1434 = vpop.xlane.xlu0 %1433
  %1435 = vadd.xlane.f32.xlu0 %v1295
  %v1436 = vpop.xlane.xlu0 %1435
  %1437 = vadd.xlane.f32.xlu0 %v1296
  %v1438 = vpop.xlane.xlu0 %1437
  %1439 = vadd.xlane.f32.xlu0 %v1297
  %v1440 = vpop.xlane.xlu0 %1439
  %1441 = vadd.xlane.f32.xlu0 %v1298
  %v1442 = vpop.xlane.xlu0 %1441
  %1443 = vadd.xlane.f32.xlu0 %v1299
  %v1444 = vpop.xlane.xlu0 %1443
  %1445 = vadd.xlane.f32.xlu0 %v1300
  %v1446 = vpop.xlane.xlu0 %1445
  %1447 = vadd.xlane.f32.xlu0 %v1301
  %v1448 = vpop.xlane.xlu0 %1447
  %1449 = vadd.xlane.f32.xlu0 %v1302
  %v1450 = vpop.xlane.xlu0 %1449
  %1451 = vadd.xlane.f32.xlu0 %v1303
  %v1452 = vpop.xlane.xlu0 %1451
  %1453 = vadd.xlane.f32.xlu0 %v1304
  %v1454 = vpop.xlane.xlu0 %1453
  %1455 = vadd.xlane.f32.xlu0 %v1305
  %v1456 = vpop.xlane.xlu0 %1455
  %1457 = vadd.xlane.f32.xlu0 %v1306
  %v1458 = vpop.xlane.xlu0 %1457
  %1459 = vadd.xlane.f32.xlu0 %v1307
  %v1460 = vpop.xlane.xlu0 %1459
  %1461 = vadd.xlane.f32.xlu0 %v1308
  %v1462 = vpop.xlane.xlu0 %1461
  %1463 = vadd.xlane.f32.xlu0 %v1309
  %v1464 = vpop.xlane.xlu0 %1463
  %1465 = vadd.xlane.f32.xlu0 %v1310
  %v1466 = vpop.xlane.xlu0 %1465
  %1467 = vadd.xlane.f32.xlu0 %v1311
  %v1468 = vpop.xlane.xlu0 %1467
  %1469 = vadd.xlane.f32.xlu0 %v1312
  %v1470 = vpop.xlane.xlu0 %1469
  %1471 = vadd.xlane.f32.xlu0 %v1313
  %v1472 = vpop.xlane.xlu0 %1471
  %1473 = vadd.xlane.f32.xlu0 %v1314
  %v1474 = vpop.xlane.xlu0 %1473
  %1475 = vadd.xlane.f32.xlu0 %v1315
  %v1476 = vpop.xlane.xlu0 %1475
  %1477 = vadd.xlane.f32.xlu0 %v1316
  %v1478 = vpop.xlane.xlu0 %1477
  %1479 = vadd.xlane.f32.xlu0 %v1317
  %v1480 = vpop.xlane.xlu0 %1479
  %1481 = vadd.xlane.f32.xlu0 %v1318
  %v1482 = vpop.xlane.xlu0 %1481
  %1483 = vadd.xlane.f32.xlu0 %v1319
  %v1484 = vpop.xlane.xlu0 %1483
  %1485 = vadd.xlane.f32.xlu0 %v1320
  %v1486 = vpop.xlane.xlu0 %1485
  %1487 = vadd.xlane.f32.xlu0 %v1321
  %v1488 = vpop.xlane.xlu0 %1487
  %1489 = vadd.xlane.f32.xlu0 %v1322
  %v1490 = vpop.xlane.xlu0 %1489
  %1491 = vadd.xlane.f32.xlu0 %v1323
  %v1492 = vpop.xlane.xlu0 %1491
  %1493 = vadd.xlane.f32.xlu0 %v1324
  %v1494 = vpop.xlane.xlu0 %1493
  %1495 = vadd.xlane.f32.xlu0 %v1325
  %v1496 = vpop.xlane.xlu0 %1495
  %1497 = vadd.xlane.f32.xlu0 %v1326
  %v1498 = vpop.xlane.xlu0 %1497
  %1499 = vadd.xlane.f32.xlu0 %v1327
  %v1500 = vpop.xlane.xlu0 %1499
  %1501 = vadd.xlane.f32.xlu0 %v1328
  %v1502 = vpop.xlane.xlu0 %1501
  %1503 = vadd.xlane.f32.xlu0 %v1329
  %v1504 = vpop.xlane.xlu0 %1503
  %1505 = vadd.xlane.f32.xlu0 %v1330
  %v1506 = vpop.xlane.xlu0 %1505
  %1507 = vadd.xlane.f32.xlu0 %v1331
  %v1508 = vpop.xlane.xlu0 %1507
  %1509 = vadd.xlane.f32.xlu0 %v1332
  %v1510 = vpop.xlane.xlu0 %1509
  %1511 = vadd.xlane.f32.xlu0 %v1333
  %v1512 = vpop.xlane.xlu0 %1511
  %1513 = vadd.xlane.f32.xlu0 %v1334
  %v1514 = vpop.xlane.xlu0 %1513
  %1515 = vadd.xlane.f32.xlu0 %v1335
  %v1516 = vpop.xlane.xlu0 %1515
  %1517 = vadd.xlane.f32.xlu0 %v1336
  %v1518 = vpop.xlane.xlu0 %1517
  %1519 = vadd.xlane.f32.xlu0 %v1337
  %v1520 = vpop.xlane.xlu0 %1519
  %1521 = vadd.xlane.f32.xlu0 %v1338
  %v1522 = vpop.xlane.xlu0 %1521
  %1523 = vadd.xlane.f32.xlu0 %v1339
  %v1524 = vpop.xlane.xlu0 %1523
  %1525 = vadd.xlane.f32.xlu0 %v1340
  %v1526 = vpop.xlane.xlu0 %1525
  %1527 = vadd.xlane.f32.xlu0 %v1341
  %v1528 = vpop.xlane.xlu0 %1527
  %1529 = vadd.xlane.f32.xlu0 %v1342
  %v1530 = vpop.xlane.xlu0 %1529
  %1531 = vadd.xlane.f32.xlu0 %v1343
  %v1532 = vpop.xlane.xlu0 %1531
  %1533 = vadd.xlane.f32.xlu0 %v1344
  %v1534 = vpop.xlane.xlu0 %1533
  %1535 = vadd.xlane.f32.xlu0 %v1345
  %v1536 = vpop.xlane.xlu0 %1535
  %1537 = vadd.xlane.f32.xlu0 %v1346
  %v1538 = vpop.xlane.xlu0 %1537
  %1539 = vadd.xlane.f32.xlu0 %v1347
  %v1540 = vpop.xlane.xlu0 %1539
  %1541 = vadd.xlane.f32.xlu0 %v1348
  %v1542 = vpop.xlane.xlu0 %1541
  %1543 = vadd.xlane.f32.xlu0 %v1349
  %v1544 = vpop.xlane.xlu0 %1543
  %1545 = vadd.xlane.f32.xlu0 %v1350
  %v1546 = vpop.xlane.xlu0 %1545
  %1547 = vadd.xlane.f32.xlu0 %v1351
  %v1548 = vpop.xlane.xlu0 %1547
  %1549 = vadd.xlane.f32.xlu0 %v1352
  %v1550 = vpop.xlane.xlu0 %1549
  %1551 = vadd.xlane.f32.xlu0 %v1353
  %v1552 = vpop.xlane.xlu0 %1551
  %1553 = vadd.xlane.f32.xlu0 %v1354
  %v1554 = vpop.xlane.xlu0 %1553
  %1555 = vadd.xlane.f32.xlu0 %v1355
  %v1556 = vpop.xlane.xlu0 %1555
  %1557 = vadd.xlane.f32.xlu0 %v1356
  %v1558 = vpop.xlane.xlu0 %1557
  %1559 = vadd.xlane.f32.xlu0 %v1357
  %v1560 = vpop.xlane.xlu0 %1559
  %1561 = vadd.xlane.f32.xlu0 %v1358
  %v1562 = vpop.xlane.xlu0 %1561
  %1563 = vadd.xlane.f32.xlu0 %v1359
  %v1564 = vpop.xlane.xlu0 %1563
  %1565 = vadd.xlane.f32.xlu0 %v1360
  %v1566 = vpop.xlane.xlu0 %1565
  %1567 = vadd.xlane.f32.xlu0 %v1361
  %v1568 = vpop.xlane.xlu0 %1567
  %1569 = vadd.xlane.f32.xlu0 %v1362
  %v1570 = vpop.xlane.xlu0 %1569
  %1571 = vadd.xlane.f32.xlu0 %v1363
  %v1572 = vpop.xlane.xlu0 %1571
  %1573 = vadd.xlane.f32.xlu0 %v1364
  %v1574 = vpop.xlane.xlu0 %1573
  %1575 = vadd.xlane.f32.xlu0 %v1365
  %v1576 = vpop.xlane.xlu0 %1575
  %1577 = vadd.xlane.f32.xlu0 %v1366
  %v1578 = vpop.xlane.xlu0 %1577
  %1579 = vadd.xlane.f32.xlu0 %v1367
  %v1580 = vpop.xlane.xlu0 %1579
  %1581 = vadd.xlane.f32.xlu0 %v1368
  %v1582 = vpop.xlane.xlu0 %1581
  %1583 = vadd.xlane.f32.xlu0 %v1369
  %v1584 = vpop.xlane.xlu0 %1583
  %1585 = vadd.xlane.f32.xlu0 %v1370
  %v1586 = vpop.xlane.xlu0 %1585
  %1587 = vadd.xlane.f32.xlu0 %v1371
  %v1588 = vpop.xlane.xlu0 %1587
  %1589 = vadd.xlane.f32.xlu0 %v1372
  %v1590 = vpop.xlane.xlu0 %1589
  %1591 = vadd.xlane.f32.xlu0 %v1373
  %v1592 = vpop.xlane.xlu0 %1591
  %1593 = vadd.xlane.f32.xlu0 %v1374
  %v1594 = vpop.xlane.xlu0 %1593
  %1595 = vadd.xlane.f32.xlu0 %v1375
  %v1596 = vpop.xlane.xlu0 %1595
  %1597 = vadd.xlane.f32.xlu0 %v1376
  %v1598 = vpop.xlane.xlu0 %1597
  %1599 = vadd.xlane.f32.xlu0 %v1377
  %v1600 = vpop.xlane.xlu0 %1599
  %1601 = vadd.xlane.f32.xlu0 %v1378
  %v1602 = vpop.xlane.xlu0 %1601
  %1603 = vadd.xlane.f32.xlu0 %v1379
  %v1604 = vpop.xlane.xlu0 %1603
  %1605 = vadd.xlane.f32.xlu0 %v1380
  %v1606 = vpop.xlane.xlu0 %1605
  %1607 = vadd.xlane.f32.xlu0 %v1381
  %v1608 = vpop.xlane.xlu0 %1607
  %1609 = vadd.xlane.f32.xlu0 %v1382
  %v1610 = vpop.xlane.xlu0 %1609
  %1611 = vadd.xlane.f32.xlu0 %v1383
  %v1612 = vpop.xlane.xlu0 %1611
  %1613 = vadd.xlane.f32.xlu0 %v1384
  %v1614 = vpop.xlane.xlu0 %1613
  %1615 = vadd.xlane.f32.xlu0 %v1385
  %v1616 = vpop.xlane.xlu0 %1615
  %1617 = vadd.xlane.f32.xlu0 %v1386
  %v1618 = vpop.xlane.xlu0 %1617
  %1619 = vadd.xlane.f32.xlu0 %v1387
  %v1620 = vpop.xlane.xlu0 %1619
  %1621 = vadd.xlane.f32.xlu0 %v1388
  %v1622 = vpop.xlane.xlu0 %1621
  %1623 = vadd.xlane.f32.xlu0 %v1389
  %v1624 = vpop.xlane.xlu0 %1623
  %1625 = vadd.xlane.f32.xlu0 %v1390
  %v1626 = vpop.xlane.xlu0 %1625
  %1627 = vadd.xlane.f32.xlu0 %v1391
  %v1628 = vpop.xlane.xlu0 %1627
  %1629 = vadd.xlane.f32.xlu0 %v1392
  %v1630 = vpop.xlane.xlu0 %1629
  %1631 = vadd.xlane.f32.xlu0 %v1393
  %v1632 = vpop.xlane.xlu0 %1631
  %1633 = vadd.xlane.f32.xlu0 %v1394
  %v1634 = vpop.xlane.xlu0 %1633
  %1635 = vadd.xlane.f32.xlu0 %v1395
  %v1636 = vpop.xlane.xlu0 %1635
  %1637 = vadd.xlane.f32.xlu0 %v1396
  %v1638 = vpop.xlane.xlu0 %1637
  %1639 = vadd.xlane.f32.xlu0 %v1397
  %v1640 = vpop.xlane.xlu0 %1639
  %1641 = vadd.xlane.f32.xlu0 %v1398
  %v1642 = vpop.xlane.xlu0 %1641
  %1643 = vadd.xlane.f32.xlu0 %v1399
  %v1644 = vpop.xlane.xlu0 %1643
  %1645 = vadd.xlane.f32.xlu0 %v1400
  %v1646 = vpop.xlane.xlu0 %1645
  %1647 = vadd.xlane.f32.xlu0 %v1401
  %v1648 = vpop.xlane.xlu0 %1647
  %1649 = vadd.xlane.f32.xlu0 %v1402
  %v1650 = vpop.xlane.xlu0 %1649
  %1651 = vadd.xlane.f32.xlu0 %v1403
  %v1652 = vpop.xlane.xlu0 %1651
  %1653 = vadd.xlane.f32.xlu0 %v1404
  %v1654 = vpop.xlane.xlu0 %1653
  %1655 = vadd.xlane.f32.xlu0 %v1405
  %v1656 = vpop.xlane.xlu0 %1655
  %1657 = vadd.xlane.f32.xlu0 %v1406
  %v1658 = vpop.xlane.xlu0 %1657
  %1659 = vadd.xlane.f32.xlu0 %v1407
  %v1660 = vpop.xlane.xlu0 %1659
  %1661 = vadd.xlane.f32.xlu0 %v1408
  %v1662 = vpop.xlane.xlu0 %1661
  %1663 = vadd.xlane.f32.xlu0 %v1409
  %v1664 = vpop.xlane.xlu0 %1663
  %1665 = vadd.xlane.f32.xlu0 %v1410
  %v1666 = vpop.xlane.xlu0 %1665
  %vm1667 = vcmp.eq.f32.partialorder %v154, 0.0
  %v1796 = vlaneseq
  %v1797 = vand.u32 %v1796, 127
  %v1798 = vlaneseq
  %v1799 = vshrl.u32 %v1798, 7
  %v1800 = vsub.s32 %v1797, %v1799
  %v1801 = vrot.slane %v1412, %v1800
  %v1802 = vadd.s32 %v1797, 4294967288
  %v1803 = vlaneseq
  %v1804 = vshrl.u32 %v1803, 7
  %v1805 = vsub.s32 %v1802, %v1804
  %v1806 = vrot.slane %v1414, %v1805
  %vm1807 = vcmask 130112
  %v1808 = vsel %vm1807, %v1806, %v1801
  %v1809 = vadd.s32 %v1797, 4294967280
  %v1810 = vlaneseq
  %v1811 = vshrl.u32 %v1810, 7
  %v1812 = vsub.s32 %v1809, %v1811
  %v1813 = vrot.slane %v1416, %v1812
  %vm1814 = vcmask 195712
  %v1815 = vsel %vm1814, %v1813, %v1808
  %v1816 = vadd.s32 %v1797, 4294967272
  %v1817 = vlaneseq
  %v1818 = vshrl.u32 %v1817, 7
  %v1819 = vsub.s32 %v1816, %v1818
  %v1820 = vrot.slane %v1418, %v1819
  %vm1821 = vcmask 261312
  %v1822 = vsel %vm1821, %v1820, %v1815
  %v1823 = vadd.s32 %v1797, 4294967264
  %v1824 = vlaneseq
  %v1825 = vshrl.u32 %v1824, 7
  %v1826 = vsub.s32 %v1823, %v1825
  %v1827 = vrot.slane %v1420, %v1826
  %vm1828 = vcmask 326912
  %v1829 = vsel %vm1828, %v1827, %v1822
  %v1830 = vadd.s32 %v1797, 4294967256
  %v1831 = vlaneseq
  %v1832 = vshrl.u32 %v1831, 7
  %v1833 = vsub.s32 %v1830, %v1832
  %v1834 = vrot.slane %v1422, %v1833
  %vm1835 = vcmask 392512
  %v1836 = vsel %vm1835, %v1834, %v1829
  %v1837 = vadd.s32 %v1797, 4294967248
  %v1838 = vlaneseq
  %v1839 = vshrl.u32 %v1838, 7
  %v1840 = vsub.s32 %v1837, %v1839
  %v1841 = vrot.slane %v1424, %v1840
  %vm1842 = vcmask 458112
  %v1843 = vsel %vm1842, %v1841, %v1836
  %v1844 = vadd.s32 %v1797, 4294967240
  %v1845 = vlaneseq
  %v1846 = vshrl.u32 %v1845, 7
  %v1847 = vsub.s32 %v1844, %v1846
  %v1848 = vrot.slane %v1426, %v1847
  %vm1849 = vcmask 523712
  %v1850 = vsel %vm1849, %v1848, %v1843
  %v1851 = vadd.s32 %v1797, 4294967232
  %v1852 = vlaneseq
  %v1853 = vshrl.u32 %v1852, 7
  %v1854 = vsub.s32 %v1851, %v1853
  %v1855 = vrot.slane %v1428, %v1854
  %vm1856 = vcmask 589312
  %v1857 = vsel %vm1856, %v1855, %v1850
  %v1858 = vadd.s32 %v1797, 4294967224
  %v1859 = vlaneseq
  %v1860 = vshrl.u32 %v1859, 7
  %v1861 = vsub.s32 %v1858, %v1860
  %v1862 = vrot.slane %v1430, %v1861
  %vm1863 = vcmask 654912
  %v1864 = vsel %vm1863, %v1862, %v1857
  %v1865 = vadd.s32 %v1797, 4294967216
  %v1866 = vlaneseq
  %v1867 = vshrl.u32 %v1866, 7
  %v1868 = vsub.s32 %v1865, %v1867
  %v1869 = vrot.slane %v1432, %v1868
  %vm1870 = vcmask 720512
  %v1871 = vsel %vm1870, %v1869, %v1864
  %v1872 = vadd.s32 %v1797, 4294967208
  %v1873 = vlaneseq
  %v1874 = vshrl.u32 %v1873, 7
  %v1875 = vsub.s32 %v1872, %v1874
  %v1876 = vrot.slane %v1434, %v1875
  %vm1877 = vcmask 786112
  %v1878 = vsel %vm1877, %v1876, %v1871
  %v1879 = vadd.s32 %v1797, 4294967200
  %v1880 = vlaneseq
  %v1881 = vshrl.u32 %v1880, 7
  %v1882 = vsub.s32 %v1879, %v1881
  %v1883 = vrot.slane %v1436, %v1882
  %vm1884 = vcmask 851712
  %v1885 = vsel %vm1884, %v1883, %v1878
  %v1886 = vadd.s32 %v1797, 4294967192
  %v1887 = vlaneseq
  %v1888 = vshrl.u32 %v1887, 7
  %v1889 = vsub.s32 %v1886, %v1888
  %v1890 = vrot.slane %v1438, %v1889
  %vm1891 = vcmask 917312
  %v1892 = vsel %vm1891, %v1890, %v1885
  %v1893 = vadd.s32 %v1797, 4294967184
  %v1894 = vlaneseq
  %v1895 = vshrl.u32 %v1894, 7
  %v1896 = vsub.s32 %v1893, %v1895
  %v1897 = vrot.slane %v1440, %v1896
  %vm1898 = vcmask 982912
  %v1899 = vsel %vm1898, %v1897, %v1892
  %v1900 = vadd.s32 %v1797, 4294967176
  %v1901 = vlaneseq
  %v1902 = vshrl.u32 %v1901, 7
  %v1903 = vsub.s32 %v1900, %v1902
  %v1904 = vrot.slane %v1442, %v1903
  %vm1905 = vcmask 1048512
  %v1906 = vsel %vm1905, %v1904, %v1899
  %v1907 = vlaneseq
  %v1908 = vshrl.u32 %v1907, 7
  %v1909 = vsub.s32 %v1797, %v1908
  %v1910 = vrot.slane %v1444, %v1909
  %v1911 = vlaneseq
  %v1912 = vshrl.u32 %v1911, 7
  %v1913 = vsub.s32 %v1802, %v1912
  %v1914 = vrot.slane %v1446, %v1913
  %v1915 = vsel %vm1807, %v1914, %v1910
  %v1916 = vlaneseq
  %v1917 = vshrl.u32 %v1916, 7
  %v1918 = vsub.s32 %v1809, %v1917
  %v1919 = vrot.slane %v1448, %v1918
  %v1920 = vsel %vm1814, %v1919, %v1915
  %v1921 = vlaneseq
  %v1922 = vshrl.u32 %v1921, 7
  %v1923 = vsub.s32 %v1816, %v1922
  %v1924 = vrot.slane %v1450, %v1923
  %v1925 = vsel %vm1821, %v1924, %v1920
  %v1926 = vlaneseq
  %v1927 = vshrl.u32 %v1926, 7
  %v1928 = vsub.s32 %v1823, %v1927
  %v1929 = vrot.slane %v1452, %v1928
  %v1930 = vsel %vm1828, %v1929, %v1925
  %v1931 = vlaneseq
  %v1932 = vshrl.u32 %v1931, 7
  %v1933 = vsub.s32 %v1830, %v1932
  %v1934 = vrot.slane %v1454, %v1933
  %v1935 = vsel %vm1835, %v1934, %v1930
  %v1936 = vlaneseq
  %v1937 = vshrl.u32 %v1936, 7
  %v1938 = vsub.s32 %v1837, %v1937
  %v1939 = vrot.slane %v1456, %v1938
  %v1940 = vsel %vm1842, %v1939, %v1935
  %v1941 = vlaneseq
  %v1942 = vshrl.u32 %v1941, 7
  %v1943 = vsub.s32 %v1844, %v1942
  %v1944 = vrot.slane %v1458, %v1943
  %v1945 = vsel %vm1849, %v1944, %v1940
  %v1946 = vlaneseq
  %v1947 = vshrl.u32 %v1946, 7
  %v1948 = vsub.s32 %v1851, %v1947
  %v1949 = vrot.slane %v1460, %v1948
  %v1950 = vsel %vm1856, %v1949, %v1945
  %v1951 = vlaneseq
  %v1952 = vshrl.u32 %v1951, 7
  %v1953 = vsub.s32 %v1858, %v1952
  %v1954 = vrot.slane %v1462, %v1953
  %v1955 = vsel %vm1863, %v1954, %v1950
  %v1956 = vlaneseq
  %v1957 = vshrl.u32 %v1956, 7
  %v1958 = vsub.s32 %v1865, %v1957
  %v1959 = vrot.slane %v1464, %v1958
  %v1960 = vsel %vm1870, %v1959, %v1955
  %v1961 = vlaneseq
  %v1962 = vshrl.u32 %v1961, 7
  %v1963 = vsub.s32 %v1872, %v1962
  %v1964 = vrot.slane %v1466, %v1963
  %v1965 = vsel %vm1877, %v1964, %v1960
  %v1966 = vlaneseq
  %v1967 = vshrl.u32 %v1966, 7
  %v1968 = vsub.s32 %v1879, %v1967
  %v1969 = vrot.slane %v1468, %v1968
  %v1970 = vsel %vm1884, %v1969, %v1965
  %v1971 = vlaneseq
  %v1972 = vshrl.u32 %v1971, 7
  %v1973 = vsub.s32 %v1886, %v1972
  %v1974 = vrot.slane %v1470, %v1973
  %v1975 = vsel %vm1891, %v1974, %v1970
  %v1976 = vlaneseq
  %v1977 = vshrl.u32 %v1976, 7
  %v1978 = vsub.s32 %v1893, %v1977
  %v1979 = vrot.slane %v1472, %v1978
  %v1980 = vsel %vm1898, %v1979, %v1975
  %v1981 = vlaneseq
  %v1982 = vshrl.u32 %v1981, 7
  %v1983 = vsub.s32 %v1900, %v1982
  %v1984 = vrot.slane %v1474, %v1983
  %v1985 = vsel %vm1905, %v1984, %v1980
  %v1986 = vlaneseq
  %v1987 = vshrl.u32 %v1986, 7
  %v1988 = vsub.s32 %v1797, %v1987
  %v1989 = vrot.slane %v1476, %v1988
  %v1990 = vlaneseq
  %v1991 = vshrl.u32 %v1990, 7
  %v1992 = vsub.s32 %v1802, %v1991
  %v1993 = vrot.slane %v1478, %v1992
  %v1994 = vsel %vm1807, %v1993, %v1989
  %v1995 = vlaneseq
  %v1996 = vshrl.u32 %v1995, 7
  %v1997 = vsub.s32 %v1809, %v1996
  %v1998 = vrot.slane %v1480, %v1997
  %v1999 = vsel %vm1814, %v1998, %v1994
  %v2000 = vlaneseq
  %v2001 = vshrl.u32 %v2000, 7
  %v2002 = vsub.s32 %v1816, %v2001
  %v2003 = vrot.slane %v1482, %v2002
  %v2004 = vsel %vm1821, %v2003, %v1999
  %v2005 = vlaneseq
  %v2006 = vshrl.u32 %v2005, 7
  %v2007 = vsub.s32 %v1823, %v2006
  %v2008 = vrot.slane %v1484, %v2007
  %v2009 = vsel %vm1828, %v2008, %v2004
  %v2010 = vlaneseq
  %v2011 = vshrl.u32 %v2010, 7
  %v2012 = vsub.s32 %v1830, %v2011
  %v2013 = vrot.slane %v1486, %v2012
  %v2014 = vsel %vm1835, %v2013, %v2009
  %v2015 = vlaneseq
  %v2016 = vshrl.u32 %v2015, 7
  %v2017 = vsub.s32 %v1837, %v2016
  %v2018 = vrot.slane %v1488, %v2017
  %v2019 = vsel %vm1842, %v2018, %v2014
  %v2020 = vlaneseq
  %v2021 = vshrl.u32 %v2020, 7
  %v2022 = vsub.s32 %v1844, %v2021
  %v2023 = vrot.slane %v1490, %v2022
  %v2024 = vsel %vm1849, %v2023, %v2019
  %v2025 = vlaneseq
  %v2026 = vshrl.u32 %v2025, 7
  %v2027 = vsub.s32 %v1851, %v2026
  %v2028 = vrot.slane %v1492, %v2027
  %v2029 = vsel %vm1856, %v2028, %v2024
  %v2030 = vlaneseq
  %v2031 = vshrl.u32 %v2030, 7
  %v2032 = vsub.s32 %v1858, %v2031
  %v2033 = vrot.slane %v1494, %v2032
  %v2034 = vsel %vm1863, %v2033, %v2029
  %v2035 = vlaneseq
  %v2036 = vshrl.u32 %v2035, 7
  %v2037 = vsub.s32 %v1865, %v2036
  %v2038 = vrot.slane %v1496, %v2037
  %v2039 = vsel %vm1870, %v2038, %v2034
  %v2040 = vlaneseq
  %v2041 = vshrl.u32 %v2040, 7
  %v2042 = vsub.s32 %v1872, %v2041
  %v2043 = vrot.slane %v1498, %v2042
  %v2044 = vsel %vm1877, %v2043, %v2039
  %v2045 = vlaneseq
  %v2046 = vshrl.u32 %v2045, 7
  %v2047 = vsub.s32 %v1879, %v2046
  %v2048 = vrot.slane %v1500, %v2047
  %v2049 = vsel %vm1884, %v2048, %v2044
  %v2050 = vlaneseq
  %v2051 = vshrl.u32 %v2050, 7
  %v2052 = vsub.s32 %v1886, %v2051
  %v2053 = vrot.slane %v1502, %v2052
  %v2054 = vsel %vm1891, %v2053, %v2049
  %v2055 = vlaneseq
  %v2056 = vshrl.u32 %v2055, 7
  %v2057 = vsub.s32 %v1893, %v2056
  %v2058 = vrot.slane %v1504, %v2057
  %v2059 = vsel %vm1898, %v2058, %v2054
  %v2060 = vlaneseq
  %v2061 = vshrl.u32 %v2060, 7
  %v2062 = vsub.s32 %v1900, %v2061
  %v2063 = vrot.slane %v1506, %v2062
  %v2064 = vsel %vm1905, %v2063, %v2059
  %v2065 = vlaneseq
  %v2066 = vshrl.u32 %v2065, 7
  %v2067 = vsub.s32 %v1797, %v2066
  %v2068 = vrot.slane %v1508, %v2067
  %v2069 = vlaneseq
  %v2070 = vshrl.u32 %v2069, 7
  %v2071 = vsub.s32 %v1802, %v2070
  %v2072 = vrot.slane %v1510, %v2071
  %v2073 = vsel %vm1807, %v2072, %v2068
  %v2074 = vlaneseq
  %v2075 = vshrl.u32 %v2074, 7
  %v2076 = vsub.s32 %v1809, %v2075
  %v2077 = vrot.slane %v1512, %v2076
  %v2078 = vsel %vm1814, %v2077, %v2073
  %v2079 = vlaneseq
  %v2080 = vshrl.u32 %v2079, 7
  %v2081 = vsub.s32 %v1816, %v2080
  %v2082 = vrot.slane %v1514, %v2081
  %v2083 = vsel %vm1821, %v2082, %v2078
  %v2084 = vlaneseq
  %v2085 = vshrl.u32 %v2084, 7
  %v2086 = vsub.s32 %v1823, %v2085
  %v2087 = vrot.slane %v1516, %v2086
  %v2088 = vsel %vm1828, %v2087, %v2083
  %v2089 = vlaneseq
  %v2090 = vshrl.u32 %v2089, 7
  %v2091 = vsub.s32 %v1830, %v2090
  %v2092 = vrot.slane %v1518, %v2091
  %v2093 = vsel %vm1835, %v2092, %v2088
  %v2094 = vlaneseq
  %v2095 = vshrl.u32 %v2094, 7
  %v2096 = vsub.s32 %v1837, %v2095
  %v2097 = vrot.slane %v1520, %v2096
  %v2098 = vsel %vm1842, %v2097, %v2093
  %v2099 = vlaneseq
  %v2100 = vshrl.u32 %v2099, 7
  %v2101 = vsub.s32 %v1844, %v2100
  %v2102 = vrot.slane %v1522, %v2101
  %v2103 = vsel %vm1849, %v2102, %v2098
  %v2104 = vlaneseq
  %v2105 = vshrl.u32 %v2104, 7
  %v2106 = vsub.s32 %v1851, %v2105
  %v2107 = vrot.slane %v1524, %v2106
  %v2108 = vsel %vm1856, %v2107, %v2103
  %v2109 = vlaneseq
  %v2110 = vshrl.u32 %v2109, 7
  %v2111 = vsub.s32 %v1858, %v2110
  %v2112 = vrot.slane %v1526, %v2111
  %v2113 = vsel %vm1863, %v2112, %v2108
  %v2114 = vlaneseq
  %v2115 = vshrl.u32 %v2114, 7
  %v2116 = vsub.s32 %v1865, %v2115
  %v2117 = vrot.slane %v1528, %v2116
  %v2118 = vsel %vm1870, %v2117, %v2113
  %v2119 = vlaneseq
  %v2120 = vshrl.u32 %v2119, 7
  %v2121 = vsub.s32 %v1872, %v2120
  %v2122 = vrot.slane %v1530, %v2121
  %v2123 = vsel %vm1877, %v2122, %v2118
  %v2124 = vlaneseq
  %v2125 = vshrl.u32 %v2124, 7
  %v2126 = vsub.s32 %v1879, %v2125
  %v2127 = vrot.slane %v1532, %v2126
  %v2128 = vsel %vm1884, %v2127, %v2123
  %v2129 = vlaneseq
  %v2130 = vshrl.u32 %v2129, 7
  %v2131 = vsub.s32 %v1886, %v2130
  %v2132 = vrot.slane %v1534, %v2131
  %v2133 = vsel %vm1891, %v2132, %v2128
  %v2134 = vlaneseq
  %v2135 = vshrl.u32 %v2134, 7
  %v2136 = vsub.s32 %v1893, %v2135
  %v2137 = vrot.slane %v1536, %v2136
  %v2138 = vsel %vm1898, %v2137, %v2133
  %v2139 = vlaneseq
  %v2140 = vshrl.u32 %v2139, 7
  %v2141 = vsub.s32 %v1900, %v2140
  %v2142 = vrot.slane %v1538, %v2141
  %v2143 = vsel %vm1905, %v2142, %v2138
  %v2144 = vlaneseq
  %v2145 = vshrl.u32 %v2144, 7
  %v2146 = vsub.s32 %v1797, %v2145
  %v2147 = vrot.slane %v1540, %v2146
  %v2148 = vlaneseq
  %v2149 = vshrl.u32 %v2148, 7
  %v2150 = vsub.s32 %v1802, %v2149
  %v2151 = vrot.slane %v1542, %v2150
  %v2152 = vsel %vm1807, %v2151, %v2147
  %v2153 = vlaneseq
  %v2154 = vshrl.u32 %v2153, 7
  %v2155 = vsub.s32 %v1809, %v2154
  %v2156 = vrot.slane %v1544, %v2155
  %v2157 = vsel %vm1814, %v2156, %v2152
  %v2158 = vlaneseq
  %v2159 = vshrl.u32 %v2158, 7
  %v2160 = vsub.s32 %v1816, %v2159
  %v2161 = vrot.slane %v1546, %v2160
  %v2162 = vsel %vm1821, %v2161, %v2157
  %v2163 = vlaneseq
  %v2164 = vshrl.u32 %v2163, 7
  %v2165 = vsub.s32 %v1823, %v2164
  %v2166 = vrot.slane %v1548, %v2165
  %v2167 = vsel %vm1828, %v2166, %v2162
  %v2168 = vlaneseq
  %v2169 = vshrl.u32 %v2168, 7
  %v2170 = vsub.s32 %v1830, %v2169
  %v2171 = vrot.slane %v1550, %v2170
  %v2172 = vsel %vm1835, %v2171, %v2167
  %v2173 = vlaneseq
  %v2174 = vshrl.u32 %v2173, 7
  %v2175 = vsub.s32 %v1837, %v2174
  %v2176 = vrot.slane %v1552, %v2175
  %v2177 = vsel %vm1842, %v2176, %v2172
  %v2178 = vlaneseq
  %v2179 = vshrl.u32 %v2178, 7
  %v2180 = vsub.s32 %v1844, %v2179
  %v2181 = vrot.slane %v1554, %v2180
  %v2182 = vsel %vm1849, %v2181, %v2177
  %v2183 = vlaneseq
  %v2184 = vshrl.u32 %v2183, 7
  %v2185 = vsub.s32 %v1851, %v2184
  %v2186 = vrot.slane %v1556, %v2185
  %v2187 = vsel %vm1856, %v2186, %v2182
  %v2188 = vlaneseq
  %v2189 = vshrl.u32 %v2188, 7
  %v2190 = vsub.s32 %v1858, %v2189
  %v2191 = vrot.slane %v1558, %v2190
  %v2192 = vsel %vm1863, %v2191, %v2187
  %v2193 = vlaneseq
  %v2194 = vshrl.u32 %v2193, 7
  %v2195 = vsub.s32 %v1865, %v2194
  %v2196 = vrot.slane %v1560, %v2195
  %v2197 = vsel %vm1870, %v2196, %v2192
  %v2198 = vlaneseq
  %v2199 = vshrl.u32 %v2198, 7
  %v2200 = vsub.s32 %v1872, %v2199
  %v2201 = vrot.slane %v1562, %v2200
  %v2202 = vsel %vm1877, %v2201, %v2197
  %v2203 = vlaneseq
  %v2204 = vshrl.u32 %v2203, 7
  %v2205 = vsub.s32 %v1879, %v2204
  %v2206 = vrot.slane %v1564, %v2205
  %v2207 = vsel %vm1884, %v2206, %v2202
  %v2208 = vlaneseq
  %v2209 = vshrl.u32 %v2208, 7
  %v2210 = vsub.s32 %v1886, %v2209
  %v2211 = vrot.slane %v1566, %v2210
  %v2212 = vsel %vm1891, %v2211, %v2207
  %v2213 = vlaneseq
  %v2214 = vshrl.u32 %v2213, 7
  %v2215 = vsub.s32 %v1893, %v2214
  %v2216 = vrot.slane %v1568, %v2215
  %v2217 = vsel %vm1898, %v2216, %v2212
  %v2218 = vlaneseq
  %v2219 = vshrl.u32 %v2218, 7
  %v2220 = vsub.s32 %v1900, %v2219
  %v2221 = vrot.slane %v1570, %v2220
  %v2222 = vsel %vm1905, %v2221, %v2217
  %v2223 = vlaneseq
  %v2224 = vshrl.u32 %v2223, 7
  %v2225 = vsub.s32 %v1797, %v2224
  %v2226 = vrot.slane %v1572, %v2225
  %v2227 = vlaneseq
  %v2228 = vshrl.u32 %v2227, 7
  %v2229 = vsub.s32 %v1802, %v2228
  %v2230 = vrot.slane %v1574, %v2229
  %v2231 = vsel %vm1807, %v2230, %v2226
  %v2232 = vlaneseq
  %v2233 = vshrl.u32 %v2232, 7
  %v2234 = vsub.s32 %v1809, %v2233
  %v2235 = vrot.slane %v1576, %v2234
  %v2236 = vsel %vm1814, %v2235, %v2231
  %v2237 = vlaneseq
  %v2238 = vshrl.u32 %v2237, 7
  %v2239 = vsub.s32 %v1816, %v2238
  %v2240 = vrot.slane %v1578, %v2239
  %v2241 = vsel %vm1821, %v2240, %v2236
  %v2242 = vlaneseq
  %v2243 = vshrl.u32 %v2242, 7
  %v2244 = vsub.s32 %v1823, %v2243
  %v2245 = vrot.slane %v1580, %v2244
  %v2246 = vsel %vm1828, %v2245, %v2241
  %v2247 = vlaneseq
  %v2248 = vshrl.u32 %v2247, 7
  %v2249 = vsub.s32 %v1830, %v2248
  %v2250 = vrot.slane %v1582, %v2249
  %v2251 = vsel %vm1835, %v2250, %v2246
  %v2252 = vlaneseq
  %v2253 = vshrl.u32 %v2252, 7
  %v2254 = vsub.s32 %v1837, %v2253
  %v2255 = vrot.slane %v1584, %v2254
  %v2256 = vsel %vm1842, %v2255, %v2251
  %v2257 = vlaneseq
  %v2258 = vshrl.u32 %v2257, 7
  %v2259 = vsub.s32 %v1844, %v2258
  %v2260 = vrot.slane %v1586, %v2259
  %v2261 = vsel %vm1849, %v2260, %v2256
  %v2262 = vlaneseq
  %v2263 = vshrl.u32 %v2262, 7
  %v2264 = vsub.s32 %v1851, %v2263
  %v2265 = vrot.slane %v1588, %v2264
  %v2266 = vsel %vm1856, %v2265, %v2261
  %v2267 = vlaneseq
  %v2268 = vshrl.u32 %v2267, 7
  %v2269 = vsub.s32 %v1858, %v2268
  %v2270 = vrot.slane %v1590, %v2269
  %v2271 = vsel %vm1863, %v2270, %v2266
  %v2272 = vlaneseq
  %v2273 = vshrl.u32 %v2272, 7
  %v2274 = vsub.s32 %v1865, %v2273
  %v2275 = vrot.slane %v1592, %v2274
  %v2276 = vsel %vm1870, %v2275, %v2271
  %v2277 = vlaneseq
  %v2278 = vshrl.u32 %v2277, 7
  %v2279 = vsub.s32 %v1872, %v2278
  %v2280 = vrot.slane %v1594, %v2279
  %v2281 = vsel %vm1877, %v2280, %v2276
  %v2282 = vlaneseq
  %v2283 = vshrl.u32 %v2282, 7
  %v2284 = vsub.s32 %v1879, %v2283
  %v2285 = vrot.slane %v1596, %v2284
  %v2286 = vsel %vm1884, %v2285, %v2281
  %v2287 = vlaneseq
  %v2288 = vshrl.u32 %v2287, 7
  %v2289 = vsub.s32 %v1886, %v2288
  %v2290 = vrot.slane %v1598, %v2289
  %v2291 = vsel %vm1891, %v2290, %v2286
  %v2292 = vlaneseq
  %v2293 = vshrl.u32 %v2292, 7
  %v2294 = vsub.s32 %v1893, %v2293
  %v2295 = vrot.slane %v1600, %v2294
  %v2296 = vsel %vm1898, %v2295, %v2291
  %v2297 = vlaneseq
  %v2298 = vshrl.u32 %v2297, 7
  %v2299 = vsub.s32 %v1900, %v2298
  %v2300 = vrot.slane %v1602, %v2299
  %v2301 = vsel %vm1905, %v2300, %v2296
  %v2302 = vlaneseq
  %v2303 = vshrl.u32 %v2302, 7
  %v2304 = vsub.s32 %v1797, %v2303
  %v2305 = vrot.slane %v1604, %v2304
  %v2306 = vlaneseq
  %v2307 = vshrl.u32 %v2306, 7
  %v2308 = vsub.s32 %v1802, %v2307
  %v2309 = vrot.slane %v1606, %v2308
  %v2310 = vsel %vm1807, %v2309, %v2305
  %v2311 = vlaneseq
  %v2312 = vshrl.u32 %v2311, 7
  %v2313 = vsub.s32 %v1809, %v2312
  %v2314 = vrot.slane %v1608, %v2313
  %v2315 = vsel %vm1814, %v2314, %v2310
  %v2316 = vlaneseq
  %v2317 = vshrl.u32 %v2316, 7
  %v2318 = vsub.s32 %v1816, %v2317
  %v2319 = vrot.slane %v1610, %v2318
  %v2320 = vsel %vm1821, %v2319, %v2315
  %v2321 = vlaneseq
  %v2322 = vshrl.u32 %v2321, 7
  %v2323 = vsub.s32 %v1823, %v2322
  %v2324 = vrot.slane %v1612, %v2323
  %v2325 = vsel %vm1828, %v2324, %v2320
  %v2326 = vlaneseq
  %v2327 = vshrl.u32 %v2326, 7
  %v2328 = vsub.s32 %v1830, %v2327
  %v2329 = vrot.slane %v1614, %v2328
  %v2330 = vsel %vm1835, %v2329, %v2325
  %v2331 = vlaneseq
  %v2332 = vshrl.u32 %v2331, 7
  %v2333 = vsub.s32 %v1837, %v2332
  %v2334 = vrot.slane %v1616, %v2333
  %v2335 = vsel %vm1842, %v2334, %v2330
  %v2336 = vlaneseq
  %v2337 = vshrl.u32 %v2336, 7
  %v2338 = vsub.s32 %v1844, %v2337
  %v2339 = vrot.slane %v1618, %v2338
  %v2340 = vsel %vm1849, %v2339, %v2335
  %v2341 = vlaneseq
  %v2342 = vshrl.u32 %v2341, 7
  %v2343 = vsub.s32 %v1851, %v2342
  %v2344 = vrot.slane %v1620, %v2343
  %v2345 = vsel %vm1856, %v2344, %v2340
  %v2346 = vlaneseq
  %v2347 = vshrl.u32 %v2346, 7
  %v2348 = vsub.s32 %v1858, %v2347
  %v2349 = vrot.slane %v1622, %v2348
  %v2350 = vsel %vm1863, %v2349, %v2345
  %v2351 = vlaneseq
  %v2352 = vshrl.u32 %v2351, 7
  %v2353 = vsub.s32 %v1865, %v2352
  %v2354 = vrot.slane %v1624, %v2353
  %v2355 = vsel %vm1870, %v2354, %v2350
  %v2356 = vlaneseq
  %v2357 = vshrl.u32 %v2356, 7
  %v2358 = vsub.s32 %v1872, %v2357
  %v2359 = vrot.slane %v1626, %v2358
  %v2360 = vsel %vm1877, %v2359, %v2355
  %v2361 = vlaneseq
  %v2362 = vshrl.u32 %v2361, 7
  %v2363 = vsub.s32 %v1879, %v2362
  %v2364 = vrot.slane %v1628, %v2363
  %v2365 = vsel %vm1884, %v2364, %v2360
  %v2366 = vlaneseq
  %v2367 = vshrl.u32 %v2366, 7
  %v2368 = vsub.s32 %v1886, %v2367
  %v2369 = vrot.slane %v1630, %v2368
  %v2370 = vsel %vm1891, %v2369, %v2365
  %v2371 = vlaneseq
  %v2372 = vshrl.u32 %v2371, 7
  %v2373 = vsub.s32 %v1893, %v2372
  %v2374 = vrot.slane %v1632, %v2373
  %v2375 = vsel %vm1898, %v2374, %v2370
  %v2376 = vlaneseq
  %v2377 = vshrl.u32 %v2376, 7
  %v2378 = vsub.s32 %v1900, %v2377
  %v2379 = vrot.slane %v1634, %v2378
  %v2380 = vsel %vm1905, %v2379, %v2375
  %v2381 = vlaneseq
  %v2382 = vshrl.u32 %v2381, 7
  %v2383 = vsub.s32 %v1797, %v2382
  %v2384 = vrot.slane %v1636, %v2383
  %v2385 = vlaneseq
  %v2386 = vshrl.u32 %v2385, 7
  %v2387 = vsub.s32 %v1802, %v2386
  %v2388 = vrot.slane %v1638, %v2387
  %v2389 = vsel %vm1807, %v2388, %v2384
  %v2390 = vlaneseq
  %v2391 = vshrl.u32 %v2390, 7
  %v2392 = vsub.s32 %v1809, %v2391
  %v2393 = vrot.slane %v1640, %v2392
  %v2394 = vsel %vm1814, %v2393, %v2389
  %v2395 = vlaneseq
  %v2396 = vshrl.u32 %v2395, 7
  %v2397 = vsub.s32 %v1816, %v2396
  %v2398 = vrot.slane %v1642, %v2397
  %v2399 = vsel %vm1821, %v2398, %v2394
  %v2400 = vlaneseq
  %v2401 = vshrl.u32 %v2400, 7
  %v2402 = vsub.s32 %v1823, %v2401
  %v2403 = vrot.slane %v1644, %v2402
  %v2404 = vsel %vm1828, %v2403, %v2399
  %v2405 = vlaneseq
  %v2406 = vshrl.u32 %v2405, 7
  %v2407 = vsub.s32 %v1830, %v2406
  %v2408 = vrot.slane %v1646, %v2407
  %v2409 = vsel %vm1835, %v2408, %v2404
  %v2410 = vlaneseq
  %v2411 = vshrl.u32 %v2410, 7
  %v2412 = vsub.s32 %v1837, %v2411
  %v2413 = vrot.slane %v1648, %v2412
  %v2414 = vsel %vm1842, %v2413, %v2409
  %v2415 = vlaneseq
  %v2416 = vshrl.u32 %v2415, 7
  %v2417 = vsub.s32 %v1844, %v2416
  %v2418 = vrot.slane %v1650, %v2417
  %v2419 = vsel %vm1849, %v2418, %v2414
  %v2420 = vlaneseq
  %v2421 = vshrl.u32 %v2420, 7
  %v2422 = vsub.s32 %v1851, %v2421
  %v2423 = vrot.slane %v1652, %v2422
  %v2424 = vsel %vm1856, %v2423, %v2419
  %v2425 = vlaneseq
  %v2426 = vshrl.u32 %v2425, 7
  %v2427 = vsub.s32 %v1858, %v2426
  %v2428 = vrot.slane %v1654, %v2427
  %v2429 = vsel %vm1863, %v2428, %v2424
  %v2430 = vlaneseq
  %v2431 = vshrl.u32 %v2430, 7
  %v2432 = vsub.s32 %v1865, %v2431
  %v2433 = vrot.slane %v1656, %v2432
  %v2434 = vsel %vm1870, %v2433, %v2429
  %v2435 = vlaneseq
  %v2436 = vshrl.u32 %v2435, 7
  %v2437 = vsub.s32 %v1872, %v2436
  %v2438 = vrot.slane %v1658, %v2437
  %v2439 = vsel %vm1877, %v2438, %v2434
  %v2440 = vlaneseq
  %v2441 = vshrl.u32 %v2440, 7
  %v2442 = vsub.s32 %v1879, %v2441
  %v2443 = vrot.slane %v1660, %v2442
  %v2444 = vsel %vm1884, %v2443, %v2439
  %v2445 = vlaneseq
  %v2446 = vshrl.u32 %v2445, 7
  %v2447 = vsub.s32 %v1886, %v2446
  %v2448 = vrot.slane %v1662, %v2447
  %v2449 = vsel %vm1891, %v2448, %v2444
  %v2450 = vlaneseq
  %v2451 = vshrl.u32 %v2450, 7
  %v2452 = vsub.s32 %v1893, %v2451
  %v2453 = vrot.slane %v1664, %v2452
  %v2454 = vsel %vm1898, %v2453, %v2449
  %v2455 = vlaneseq
  %v2456 = vshrl.u32 %v2455, 7
  %v2457 = vsub.s32 %v1900, %v2456
  %v2458 = vrot.slane %v1666, %v2457
  %v2459 = vsel %vm1905, %v2458, %v2454
  %vm2460 = vcmask 1041409
  %v2461 = vsel %vm2460, %v1985, %v1906
  %vm2462 = vcmask 1042434
  %v2463 = vsel %vm2462, %v2064, %v2461
  %vm2464 = vcmask 1043459
  %v2465 = vsel %vm2464, %v2143, %v2463
  %vm2466 = vcmask 1044484
  %v2467 = vsel %vm2466, %v2222, %v2465
  %vm2468 = vcmask 1045509
  %v2469 = vsel %vm2468, %v2301, %v2467
  %vm2470 = vcmask 1046534
  %v2471 = vsel %vm2470, %v2380, %v2469
  %vm2472 = vcmask 1047559
  %v2473 = vsel %vm2472, %v2459, %v2471
  %v2475 = vsel %vm1667, -1e+09, %v2473
  %2476 = vmax.xlane.f32.xlu0 %v2475
  %v2477 = vpop.xlane.xlu0 %2476
  %v2478 = vsub.f32 %v2475, %v2477
  %v2479 = vmul.f32 %v2478, 1.442695
  %v2480 = vpow.pop %v2479
  %2481 = vadd.xlane.f32.xlu0 %v2480
  %v2482 = vpop.xlane.xlu0 %2481
  %v2483 = vrcp.pop %v2482
  %v2484 = vmul.f32 %v2480, %v2483
  %2485 = vst [vmem:[%s7] sm:$0xff] %v2484
  %v2486 = vlaneseq
  %v2487 = vshrl.u32 %v2486, 7
  %v2488 = vsub.s32 0, %v2487
  %v2489 = vrot.slane %v2484, %v2488
  %2491 = vbcast.lane.b32.xlu0 %v2489, 256
  %v2492 = vpop.permute.xlu0 %2491
  %s2494 = sor.u32 256, 8
  %2495 = vbcast.lane.b32.xlu0 %v2489, %s2494
  %v2496 = vpop.permute.xlu0 %2495
  %s2498 = sor.u32 256, 16
  %2499 = vbcast.lane.b32.xlu0 %v2489, %s2498
  %v2500 = vpop.permute.xlu0 %2499
  %s2502 = sor.u32 256, 24
  %2503 = vbcast.lane.b32.xlu0 %v2489, %s2502
  %v2504 = vpop.permute.xlu0 %2503
  %s2506 = sor.u32 256, 32
  %2507 = vbcast.lane.b32.xlu0 %v2489, %s2506
  %v2508 = vpop.permute.xlu0 %2507
  %s2510 = sor.u32 256, 40
  %2511 = vbcast.lane.b32.xlu0 %v2489, %s2510
  %v2512 = vpop.permute.xlu0 %2511
  %s2514 = sor.u32 256, 48
  %2515 = vbcast.lane.b32.xlu0 %v2489, %s2514
  %v2516 = vpop.permute.xlu0 %2515
  %s2518 = sor.u32 256, 56
  %2519 = vbcast.lane.b32.xlu0 %v2489, %s2518
  %v2520 = vpop.permute.xlu0 %2519
  %s2522 = sor.u32 256, 64
  %2523 = vbcast.lane.b32.xlu0 %v2489, %s2522
  %v2524 = vpop.permute.xlu0 %2523
  %s2526 = sor.u32 256, 72
  %2527 = vbcast.lane.b32.xlu0 %v2489, %s2526
  %v2528 = vpop.permute.xlu0 %2527
  %s2530 = sor.u32 256, 80
  %2531 = vbcast.lane.b32.xlu0 %v2489, %s2530
  %v2532 = vpop.permute.xlu0 %2531
  %s2534 = sor.u32 256, 88
  %2535 = vbcast.lane.b32.xlu0 %v2489, %s2534
  %v2536 = vpop.permute.xlu0 %2535
  %s2538 = sor.u32 256, 96
  %2539 = vbcast.lane.b32.xlu0 %v2489, %s2538
  %v2540 = vpop.permute.xlu0 %2539
  %s2542 = sor.u32 256, 104
  %2543 = vbcast.lane.b32.xlu0 %v2489, %s2542
  %v2544 = vpop.permute.xlu0 %2543
  %s2546 = sor.u32 256, 112
  %2547 = vbcast.lane.b32.xlu0 %v2489, %s2546
  %v2548 = vpop.permute.xlu0 %2547
  %s2550 = sor.u32 256, 120
  %2551 = vbcast.lane.b32.xlu0 %v2489, %s2550
  %v2552 = vpop.permute.xlu0 %2551
  %v2553 = vlaneseq
  %v2554 = vshrl.u32 %v2553, 7
  %v2555 = vsub.s32 1, %v2554
  %v2556 = vrot.slane %v2484, %v2555
  %2558 = vbcast.lane.b32.xlu0 %v2556, 256
  %v2559 = vpop.permute.xlu0 %2558
  %s2561 = sor.u32 256, 8
  %2562 = vbcast.lane.b32.xlu0 %v2556, %s2561
  %v2563 = vpop.permute.xlu0 %2562
  %s2565 = sor.u32 256, 16
  %2566 = vbcast.lane.b32.xlu0 %v2556, %s2565
  %v2567 = vpop.permute.xlu0 %2566
  %s2569 = sor.u32 256, 24
  %2570 = vbcast.lane.b32.xlu0 %v2556, %s2569
  %v2571 = vpop.permute.xlu0 %2570
  %s2573 = sor.u32 256, 32
  %2574 = vbcast.lane.b32.xlu0 %v2556, %s2573
  %v2575 = vpop.permute.xlu0 %2574
  %s2577 = sor.u32 256, 40
  %2578 = vbcast.lane.b32.xlu0 %v2556, %s2577
  %v2579 = vpop.permute.xlu0 %2578
  %s2581 = sor.u32 256, 48
  %2582 = vbcast.lane.b32.xlu0 %v2556, %s2581
  %v2583 = vpop.permute.xlu0 %2582
  %s2585 = sor.u32 256, 56
  %2586 = vbcast.lane.b32.xlu0 %v2556, %s2585
  %v2587 = vpop.permute.xlu0 %2586
  %s2589 = sor.u32 256, 64
  %2590 = vbcast.lane.b32.xlu0 %v2556, %s2589
  %v2591 = vpop.permute.xlu0 %2590
  %s2593 = sor.u32 256, 72
  %2594 = vbcast.lane.b32.xlu0 %v2556, %s2593
  %v2595 = vpop.permute.xlu0 %2594
  %s2597 = sor.u32 256, 80
  %2598 = vbcast.lane.b32.xlu0 %v2556, %s2597
  %v2599 = vpop.permute.xlu0 %2598
  %s2601 = sor.u32 256, 88
  %2602 = vbcast.lane.b32.xlu0 %v2556, %s2601
  %v2603 = vpop.permute.xlu0 %2602
  %s2605 = sor.u32 256, 96
  %2606 = vbcast.lane.b32.xlu0 %v2556, %s2605
  %v2607 = vpop.permute.xlu0 %2606
  %s2609 = sor.u32 256, 104
  %2610 = vbcast.lane.b32.xlu0 %v2556, %s2609
  %v2611 = vpop.permute.xlu0 %2610
  %s2613 = sor.u32 256, 112
  %2614 = vbcast.lane.b32.xlu0 %v2556, %s2613
  %v2615 = vpop.permute.xlu0 %2614
  %s2617 = sor.u32 256, 120
  %2618 = vbcast.lane.b32.xlu0 %v2556, %s2617
  %v2619 = vpop.permute.xlu0 %2618
  %v2620 = vlaneseq
  %v2621 = vshrl.u32 %v2620, 7
  %v2622 = vsub.s32 2, %v2621
  %v2623 = vrot.slane %v2484, %v2622
  %2625 = vbcast.lane.b32.xlu0 %v2623, 256
  %v2626 = vpop.permute.xlu0 %2625
  %s2628 = sor.u32 256, 8
  %2629 = vbcast.lane.b32.xlu0 %v2623, %s2628
  %v2630 = vpop.permute.xlu0 %2629
  %s2632 = sor.u32 256, 16
  %2633 = vbcast.lane.b32.xlu0 %v2623, %s2632
  %v2634 = vpop.permute.xlu0 %2633
  %s2636 = sor.u32 256, 24
  %2637 = vbcast.lane.b32.xlu0 %v2623, %s2636
  %v2638 = vpop.permute.xlu0 %2637
  %s2640 = sor.u32 256, 32
  %2641 = vbcast.lane.b32.xlu0 %v2623, %s2640
  %v2642 = vpop.permute.xlu0 %2641
  %s2644 = sor.u32 256, 40
  %2645 = vbcast.lane.b32.xlu0 %v2623, %s2644
  %v2646 = vpop.permute.xlu0 %2645
  %s2648 = sor.u32 256, 48
  %2649 = vbcast.lane.b32.xlu0 %v2623, %s2648
  %v2650 = vpop.permute.xlu0 %2649
  %s2652 = sor.u32 256, 56
  %2653 = vbcast.lane.b32.xlu0 %v2623, %s2652
  %v2654 = vpop.permute.xlu0 %2653
  %s2656 = sor.u32 256, 64
  %2657 = vbcast.lane.b32.xlu0 %v2623, %s2656
  %v2658 = vpop.permute.xlu0 %2657
  %s2660 = sor.u32 256, 72
  %2661 = vbcast.lane.b32.xlu0 %v2623, %s2660
  %v2662 = vpop.permute.xlu0 %2661
  %s2664 = sor.u32 256, 80
  %2665 = vbcast.lane.b32.xlu0 %v2623, %s2664
  %v2666 = vpop.permute.xlu0 %2665
  %s2668 = sor.u32 256, 88
  %2669 = vbcast.lane.b32.xlu0 %v2623, %s2668
  %v2670 = vpop.permute.xlu0 %2669
  %s2672 = sor.u32 256, 96
  %2673 = vbcast.lane.b32.xlu0 %v2623, %s2672
  %v2674 = vpop.permute.xlu0 %2673
  %s2676 = sor.u32 256, 104
  %2677 = vbcast.lane.b32.xlu0 %v2623, %s2676
  %v2678 = vpop.permute.xlu0 %2677
  %s2680 = sor.u32 256, 112
  %2681 = vbcast.lane.b32.xlu0 %v2623, %s2680
  %v2682 = vpop.permute.xlu0 %2681
  %s2684 = sor.u32 256, 120
  %2685 = vbcast.lane.b32.xlu0 %v2623, %s2684
  %v2686 = vpop.permute.xlu0 %2685
  %v2687 = vlaneseq
  %v2688 = vshrl.u32 %v2687, 7
  %v2689 = vsub.s32 3, %v2688
  %v2690 = vrot.slane %v2484, %v2689
  %2692 = vbcast.lane.b32.xlu0 %v2690, 256
  %v2693 = vpop.permute.xlu0 %2692
  %s2695 = sor.u32 256, 8
  %2696 = vbcast.lane.b32.xlu0 %v2690, %s2695
  %v2697 = vpop.permute.xlu0 %2696
  %s2699 = sor.u32 256, 16
  %2700 = vbcast.lane.b32.xlu0 %v2690, %s2699
  %v2701 = vpop.permute.xlu0 %2700
  %s2703 = sor.u32 256, 24
  %2704 = vbcast.lane.b32.xlu0 %v2690, %s2703
  %v2705 = vpop.permute.xlu0 %2704
  %s2707 = sor.u32 256, 32
  %2708 = vbcast.lane.b32.xlu0 %v2690, %s2707
  %v2709 = vpop.permute.xlu0 %2708
  %s2711 = sor.u32 256, 40
  %2712 = vbcast.lane.b32.xlu0 %v2690, %s2711
  %v2713 = vpop.permute.xlu0 %2712
  %s2715 = sor.u32 256, 48
  %2716 = vbcast.lane.b32.xlu0 %v2690, %s2715
  %v2717 = vpop.permute.xlu0 %2716
  %s2719 = sor.u32 256, 56
  %2720 = vbcast.lane.b32.xlu0 %v2690, %s2719
  %v2721 = vpop.permute.xlu0 %2720
  %s2723 = sor.u32 256, 64
  %2724 = vbcast.lane.b32.xlu0 %v2690, %s2723
  %v2725 = vpop.permute.xlu0 %2724
  %s2727 = sor.u32 256, 72
  %2728 = vbcast.lane.b32.xlu0 %v2690, %s2727
  %v2729 = vpop.permute.xlu0 %2728
  %s2731 = sor.u32 256, 80
  %2732 = vbcast.lane.b32.xlu0 %v2690, %s2731
  %v2733 = vpop.permute.xlu0 %2732
  %s2735 = sor.u32 256, 88
  %2736 = vbcast.lane.b32.xlu0 %v2690, %s2735
  %v2737 = vpop.permute.xlu0 %2736
  %s2739 = sor.u32 256, 96
  %2740 = vbcast.lane.b32.xlu0 %v2690, %s2739
  %v2741 = vpop.permute.xlu0 %2740
  %s2743 = sor.u32 256, 104
  %2744 = vbcast.lane.b32.xlu0 %v2690, %s2743
  %v2745 = vpop.permute.xlu0 %2744
  %s2747 = sor.u32 256, 112
  %2748 = vbcast.lane.b32.xlu0 %v2690, %s2747
  %v2749 = vpop.permute.xlu0 %2748
  %s2751 = sor.u32 256, 120
  %2752 = vbcast.lane.b32.xlu0 %v2690, %s2751
  %v2753 = vpop.permute.xlu0 %2752
  %v2754 = vlaneseq
  %v2755 = vshrl.u32 %v2754, 7
  %v2756 = vsub.s32 4, %v2755
  %v2757 = vrot.slane %v2484, %v2756
  %2759 = vbcast.lane.b32.xlu0 %v2757, 256
  %v2760 = vpop.permute.xlu0 %2759
  %s2762 = sor.u32 256, 8
  %2763 = vbcast.lane.b32.xlu0 %v2757, %s2762
  %v2764 = vpop.permute.xlu0 %2763
  %s2766 = sor.u32 256, 16
  %2767 = vbcast.lane.b32.xlu0 %v2757, %s2766
  %v2768 = vpop.permute.xlu0 %2767
  %s2770 = sor.u32 256, 24
  %2771 = vbcast.lane.b32.xlu0 %v2757, %s2770
  %v2772 = vpop.permute.xlu0 %2771
  %s2774 = sor.u32 256, 32
  %2775 = vbcast.lane.b32.xlu0 %v2757, %s2774
  %v2776 = vpop.permute.xlu0 %2775
  %s2778 = sor.u32 256, 40
  %2779 = vbcast.lane.b32.xlu0 %v2757, %s2778
  %v2780 = vpop.permute.xlu0 %2779
  %s2782 = sor.u32 256, 48
  %2783 = vbcast.lane.b32.xlu0 %v2757, %s2782
  %v2784 = vpop.permute.xlu0 %2783
  %s2786 = sor.u32 256, 56
  %2787 = vbcast.lane.b32.xlu0 %v2757, %s2786
  %v2788 = vpop.permute.xlu0 %2787
  %s2790 = sor.u32 256, 64
  %2791 = vbcast.lane.b32.xlu0 %v2757, %s2790
  %v2792 = vpop.permute.xlu0 %2791
  %s2794 = sor.u32 256, 72
  %2795 = vbcast.lane.b32.xlu0 %v2757, %s2794
  %v2796 = vpop.permute.xlu0 %2795
  %s2798 = sor.u32 256, 80
  %2799 = vbcast.lane.b32.xlu0 %v2757, %s2798
  %v2800 = vpop.permute.xlu0 %2799
  %s2802 = sor.u32 256, 88
  %2803 = vbcast.lane.b32.xlu0 %v2757, %s2802
  %v2804 = vpop.permute.xlu0 %2803
  %s2806 = sor.u32 256, 96
  %2807 = vbcast.lane.b32.xlu0 %v2757, %s2806
  %v2808 = vpop.permute.xlu0 %2807
  %s2810 = sor.u32 256, 104
  %2811 = vbcast.lane.b32.xlu0 %v2757, %s2810
  %v2812 = vpop.permute.xlu0 %2811
  %s2814 = sor.u32 256, 112
  %2815 = vbcast.lane.b32.xlu0 %v2757, %s2814
  %v2816 = vpop.permute.xlu0 %2815
  %s2818 = sor.u32 256, 120
  %2819 = vbcast.lane.b32.xlu0 %v2757, %s2818
  %v2820 = vpop.permute.xlu0 %2819
  %v2821 = vlaneseq
  %v2822 = vshrl.u32 %v2821, 7
  %v2823 = vsub.s32 5, %v2822
  %v2824 = vrot.slane %v2484, %v2823
  %2826 = vbcast.lane.b32.xlu0 %v2824, 256
  %v2827 = vpop.permute.xlu0 %2826
  %s2829 = sor.u32 256, 8
  %2830 = vbcast.lane.b32.xlu0 %v2824, %s2829
  %v2831 = vpop.permute.xlu0 %2830
  %s2833 = sor.u32 256, 16
  %2834 = vbcast.lane.b32.xlu0 %v2824, %s2833
  %v2835 = vpop.permute.xlu0 %2834
  %s2837 = sor.u32 256, 24
  %2838 = vbcast.lane.b32.xlu0 %v2824, %s2837
  %v2839 = vpop.permute.xlu0 %2838
  %s2841 = sor.u32 256, 32
  %2842 = vbcast.lane.b32.xlu0 %v2824, %s2841
  %v2843 = vpop.permute.xlu0 %2842
  %s2845 = sor.u32 256, 40
  %2846 = vbcast.lane.b32.xlu0 %v2824, %s2845
  %v2847 = vpop.permute.xlu0 %2846
  %s2849 = sor.u32 256, 48
  %2850 = vbcast.lane.b32.xlu0 %v2824, %s2849
  %v2851 = vpop.permute.xlu0 %2850
  %s2853 = sor.u32 256, 56
  %2854 = vbcast.lane.b32.xlu0 %v2824, %s2853
  %v2855 = vpop.permute.xlu0 %2854
  %s2857 = sor.u32 256, 64
  %2858 = vbcast.lane.b32.xlu0 %v2824, %s2857
  %v2859 = vpop.permute.xlu0 %2858
  %s2861 = sor.u32 256, 72
  %2862 = vbcast.lane.b32.xlu0 %v2824, %s2861
  %v2863 = vpop.permute.xlu0 %2862
  %s2865 = sor.u32 256, 80
  %2866 = vbcast.lane.b32.xlu0 %v2824, %s2865
  %v2867 = vpop.permute.xlu0 %2866
  %s2869 = sor.u32 256, 88
  %2870 = vbcast.lane.b32.xlu0 %v2824, %s2869
  %v2871 = vpop.permute.xlu0 %2870
  %s2873 = sor.u32 256, 96
  %2874 = vbcast.lane.b32.xlu0 %v2824, %s2873
  %v2875 = vpop.permute.xlu0 %2874
  %s2877 = sor.u32 256, 104
  %2878 = vbcast.lane.b32.xlu0 %v2824, %s2877
  %v2879 = vpop.permute.xlu0 %2878
  %s2881 = sor.u32 256, 112
  %2882 = vbcast.lane.b32.xlu0 %v2824, %s2881
  %v2883 = vpop.permute.xlu0 %2882
  %s2885 = sor.u32 256, 120
  %2886 = vbcast.lane.b32.xlu0 %v2824, %s2885
  %v2887 = vpop.permute.xlu0 %2886
  %v2888 = vlaneseq
  %v2889 = vshrl.u32 %v2888, 7
  %v2890 = vsub.s32 6, %v2889
  %v2891 = vrot.slane %v2484, %v2890
  %2893 = vbcast.lane.b32.xlu0 %v2891, 256
  %v2894 = vpop.permute.xlu0 %2893
  %s2896 = sor.u32 256, 8
  %2897 = vbcast.lane.b32.xlu0 %v2891, %s2896
  %v2898 = vpop.permute.xlu0 %2897
  %s2900 = sor.u32 256, 16
  %2901 = vbcast.lane.b32.xlu0 %v2891, %s2900
  %v2902 = vpop.permute.xlu0 %2901
  %s2904 = sor.u32 256, 24
  %2905 = vbcast.lane.b32.xlu0 %v2891, %s2904
  %v2906 = vpop.permute.xlu0 %2905
  %s2908 = sor.u32 256, 32
  %2909 = vbcast.lane.b32.xlu0 %v2891, %s2908
  %v2910 = vpop.permute.xlu0 %2909
  %s2912 = sor.u32 256, 40
  %2913 = vbcast.lane.b32.xlu0 %v2891, %s2912
  %v2914 = vpop.permute.xlu0 %2913
  %s2916 = sor.u32 256, 48
  %2917 = vbcast.lane.b32.xlu0 %v2891, %s2916
  %v2918 = vpop.permute.xlu0 %2917
  %s2920 = sor.u32 256, 56
  %2921 = vbcast.lane.b32.xlu0 %v2891, %s2920
  %v2922 = vpop.permute.xlu0 %2921
  %s2924 = sor.u32 256, 64
  %2925 = vbcast.lane.b32.xlu0 %v2891, %s2924
  %v2926 = vpop.permute.xlu0 %2925
  %s2928 = sor.u32 256, 72
  %2929 = vbcast.lane.b32.xlu0 %v2891, %s2928
  %v2930 = vpop.permute.xlu0 %2929
  %s2932 = sor.u32 256, 80
  %2933 = vbcast.lane.b32.xlu0 %v2891, %s2932
  %v2934 = vpop.permute.xlu0 %2933
  %s2936 = sor.u32 256, 88
  %2937 = vbcast.lane.b32.xlu0 %v2891, %s2936
  %v2938 = vpop.permute.xlu0 %2937
  %s2940 = sor.u32 256, 96
  %2941 = vbcast.lane.b32.xlu0 %v2891, %s2940
  %v2942 = vpop.permute.xlu0 %2941
  %s2944 = sor.u32 256, 104
  %2945 = vbcast.lane.b32.xlu0 %v2891, %s2944
  %v2946 = vpop.permute.xlu0 %2945
  %s2948 = sor.u32 256, 112
  %2949 = vbcast.lane.b32.xlu0 %v2891, %s2948
  %v2950 = vpop.permute.xlu0 %2949
  %s2952 = sor.u32 256, 120
  %2953 = vbcast.lane.b32.xlu0 %v2891, %s2952
  %v2954 = vpop.permute.xlu0 %2953
  %v2955 = vlaneseq
  %v2956 = vshrl.u32 %v2955, 7
  %v2957 = vsub.s32 7, %v2956
  %v2958 = vrot.slane %v2484, %v2957
  %2960 = vbcast.lane.b32.xlu0 %v2958, 256
  %v2961 = vpop.permute.xlu0 %2960
  %s2963 = sor.u32 256, 8
  %2964 = vbcast.lane.b32.xlu0 %v2958, %s2963
  %v2965 = vpop.permute.xlu0 %2964
  %s2967 = sor.u32 256, 16
  %2968 = vbcast.lane.b32.xlu0 %v2958, %s2967
  %v2969 = vpop.permute.xlu0 %2968
  %s2971 = sor.u32 256, 24
  %2972 = vbcast.lane.b32.xlu0 %v2958, %s2971
  %v2973 = vpop.permute.xlu0 %2972
  %s2975 = sor.u32 256, 32
  %2976 = vbcast.lane.b32.xlu0 %v2958, %s2975
  %v2977 = vpop.permute.xlu0 %2976
  %s2979 = sor.u32 256, 40
  %2980 = vbcast.lane.b32.xlu0 %v2958, %s2979
  %v2981 = vpop.permute.xlu0 %2980
  %s2983 = sor.u32 256, 48
  %2984 = vbcast.lane.b32.xlu0 %v2958, %s2983
  %v2985 = vpop.permute.xlu0 %2984
  %s2987 = sor.u32 256, 56
  %2988 = vbcast.lane.b32.xlu0 %v2958, %s2987
  %v2989 = vpop.permute.xlu0 %2988
  %s2991 = sor.u32 256, 64
  %2992 = vbcast.lane.b32.xlu0 %v2958, %s2991
  %v2993 = vpop.permute.xlu0 %2992
  %s2995 = sor.u32 256, 72
  %2996 = vbcast.lane.b32.xlu0 %v2958, %s2995
  %v2997 = vpop.permute.xlu0 %2996
  %s2999 = sor.u32 256, 80
  %3000 = vbcast.lane.b32.xlu0 %v2958, %s2999
  %v3001 = vpop.permute.xlu0 %3000
  %s3003 = sor.u32 256, 88
  %3004 = vbcast.lane.b32.xlu0 %v2958, %s3003
  %v3005 = vpop.permute.xlu0 %3004
  %s3007 = sor.u32 256, 96
  %3008 = vbcast.lane.b32.xlu0 %v2958, %s3007
  %v3009 = vpop.permute.xlu0 %3008
  %s3011 = sor.u32 256, 104
  %3012 = vbcast.lane.b32.xlu0 %v2958, %s3011
  %v3013 = vpop.permute.xlu0 %3012
  %s3015 = sor.u32 256, 112
  %3016 = vbcast.lane.b32.xlu0 %v2958, %s3015
  %v3017 = vpop.permute.xlu0 %3016
  %s3019 = sor.u32 256, 120
  %3020 = vbcast.lane.b32.xlu0 %v2958, %s3019
  %v3021 = vpop.permute.xlu0 %3020
  %v3022 = vunpack.c.l.bf16 %v26
  %v3023 = vunpack.c.l.bf16 %v27
  %v3024 = vunpack.c.l.bf16 %v28
  %v3025 = vunpack.c.l.bf16 %v29
  %v3026 = vunpack.c.l.bf16 %v30
  %v3027 = vunpack.c.l.bf16 %v31
  %v3028 = vunpack.c.l.bf16 %v32
  %v3029 = vunpack.c.l.bf16 %v33
  %v3030 = vunpack.c.l.bf16 %v34
  %v3031 = vunpack.c.l.bf16 %v35
  %v3032 = vunpack.c.l.bf16 %v36
  %v3033 = vunpack.c.l.bf16 %v37
  %v3034 = vunpack.c.l.bf16 %v38
  %v3035 = vunpack.c.l.bf16 %v39
  %v3036 = vunpack.c.l.bf16 %v40
  %v3037 = vunpack.c.l.bf16 %v41
  %v3038 = vunpack.c.l.bf16 %v42
  %v3039 = vunpack.c.l.bf16 %v43
  %v3040 = vunpack.c.l.bf16 %v44
  %v3041 = vunpack.c.l.bf16 %v45
  %v3042 = vunpack.c.l.bf16 %v46
  %v3043 = vunpack.c.l.bf16 %v47
  %v3044 = vunpack.c.l.bf16 %v48
  %v3045 = vunpack.c.l.bf16 %v49
  %v3046 = vunpack.c.l.bf16 %v50
  %v3047 = vunpack.c.l.bf16 %v51
  %v3048 = vunpack.c.l.bf16 %v52
  %v3049 = vunpack.c.l.bf16 %v53
  %v3050 = vunpack.c.l.bf16 %v54
  %v3051 = vunpack.c.l.bf16 %v55
  %v3052 = vunpack.c.l.bf16 %v56
  %v3053 = vunpack.c.l.bf16 %v57
  %v3054 = vunpack.c.l.bf16 %v58
  %v3055 = vunpack.c.l.bf16 %v59
  %v3056 = vunpack.c.l.bf16 %v60
  %v3057 = vunpack.c.l.bf16 %v61
  %v3058 = vunpack.c.l.bf16 %v62
  %v3059 = vunpack.c.l.bf16 %v63
  %v3060 = vunpack.c.l.bf16 %v64
  %v3061 = vunpack.c.l.bf16 %v65
  %v3062 = vunpack.c.l.bf16 %v66
  %v3063 = vunpack.c.l.bf16 %v67
  %v3064 = vunpack.c.l.bf16 %v68
  %v3065 = vunpack.c.l.bf16 %v69
  %v3066 = vunpack.c.l.bf16 %v70
  %v3067 = vunpack.c.l.bf16 %v71
  %v3068 = vunpack.c.l.bf16 %v72
  %v3069 = vunpack.c.l.bf16 %v73
  %v3070 = vunpack.c.l.bf16 %v74
  %v3071 = vunpack.c.l.bf16 %v75
  %v3072 = vunpack.c.l.bf16 %v76
  %v3073 = vunpack.c.l.bf16 %v77
  %v3074 = vunpack.c.l.bf16 %v78
  %v3075 = vunpack.c.l.bf16 %v79
  %v3076 = vunpack.c.l.bf16 %v80
  %v3077 = vunpack.c.l.bf16 %v81
  %v3078 = vunpack.c.l.bf16 %v82
  %v3079 = vunpack.c.l.bf16 %v83
  %v3080 = vunpack.c.l.bf16 %v84
  %v3081 = vunpack.c.l.bf16 %v85
  %v3082 = vunpack.c.l.bf16 %v86
  %v3083 = vunpack.c.l.bf16 %v87
  %v3084 = vunpack.c.l.bf16 %v88
  %v3085 = vunpack.c.l.bf16 %v89
  %v3086 = vunpack.c.l.bf16 %v90
  %v3087 = vunpack.c.l.bf16 %v91
  %v3088 = vunpack.c.l.bf16 %v92
  %v3089 = vunpack.c.l.bf16 %v93
  %v3090 = vunpack.c.l.bf16 %v94
  %v3091 = vunpack.c.l.bf16 %v95
  %v3092 = vunpack.c.l.bf16 %v96
  %v3093 = vunpack.c.l.bf16 %v97
  %v3094 = vunpack.c.l.bf16 %v98
  %v3095 = vunpack.c.l.bf16 %v99
  %v3096 = vunpack.c.l.bf16 %v100
  %v3097 = vunpack.c.l.bf16 %v101
  %v3098 = vunpack.c.l.bf16 %v102
  %v3099 = vunpack.c.l.bf16 %v103
  %v3100 = vunpack.c.l.bf16 %v104
  %v3101 = vunpack.c.l.bf16 %v105
  %v3102 = vunpack.c.l.bf16 %v106
  %v3103 = vunpack.c.l.bf16 %v107
  %v3104 = vunpack.c.l.bf16 %v108
  %v3105 = vunpack.c.l.bf16 %v109
  %v3106 = vunpack.c.l.bf16 %v110
  %v3107 = vunpack.c.l.bf16 %v111
  %v3108 = vunpack.c.l.bf16 %v112
  %v3109 = vunpack.c.l.bf16 %v113
  %v3110 = vunpack.c.l.bf16 %v114
  %v3111 = vunpack.c.l.bf16 %v115
  %v3112 = vunpack.c.l.bf16 %v116
  %v3113 = vunpack.c.l.bf16 %v117
  %v3114 = vunpack.c.l.bf16 %v118
  %v3115 = vunpack.c.l.bf16 %v119
  %v3116 = vunpack.c.l.bf16 %v120
  %v3117 = vunpack.c.l.bf16 %v121
  %v3118 = vunpack.c.l.bf16 %v122
  %v3119 = vunpack.c.l.bf16 %v123
  %v3120 = vunpack.c.l.bf16 %v124
  %v3121 = vunpack.c.l.bf16 %v125
  %v3122 = vunpack.c.l.bf16 %v126
  %v3123 = vunpack.c.l.bf16 %v127
  %v3124 = vunpack.c.l.bf16 %v128
  %v3125 = vunpack.c.l.bf16 %v129
  %v3126 = vunpack.c.l.bf16 %v130
  %v3127 = vunpack.c.l.bf16 %v131
  %v3128 = vunpack.c.l.bf16 %v132
  %v3129 = vunpack.c.l.bf16 %v133
  %v3130 = vunpack.c.l.bf16 %v134
  %v3131 = vunpack.c.l.bf16 %v135
  %v3132 = vunpack.c.l.bf16 %v136
  %v3133 = vunpack.c.l.bf16 %v137
  %v3134 = vunpack.c.l.bf16 %v138
  %v3135 = vunpack.c.l.bf16 %v139
  %v3136 = vunpack.c.l.bf16 %v140
  %v3137 = vunpack.c.l.bf16 %v141
  %v3138 = vunpack.c.l.bf16 %v142
  %v3139 = vunpack.c.l.bf16 %v143
  %v3140 = vunpack.c.l.bf16 %v144
  %v3141 = vunpack.c.l.bf16 %v145
  %v3142 = vunpack.c.l.bf16 %v146
  %v3143 = vunpack.c.l.bf16 %v147
  %v3144 = vunpack.c.l.bf16 %v148
  %v3145 = vunpack.c.l.bf16 %v149
  %v3146 = vunpack.c.l.bf16 %v150
  %v3147 = vunpack.c.l.bf16 %v151
  %v3148 = vunpack.c.l.bf16 %v152
  %v3149 = vunpack.c.l.bf16 %v153
  %v3150 = vmul.f32 %v2492, %v3022
  %v3151 = vmul.f32 %v2496, %v3023
  %v3152 = vmul.f32 %v2500, %v3024
  %v3153 = vmul.f32 %v2504, %v3025
  %v3154 = vmul.f32 %v2508, %v3026
  %v3155 = vmul.f32 %v2512, %v3027
  %v3156 = vmul.f32 %v2516, %v3028
  %v3157 = vmul.f32 %v2520, %v3029
  %v3158 = vmul.f32 %v2524, %v3030
  %v3159 = vmul.f32 %v2528, %v3031
  %v3160 = vmul.f32 %v2532, %v3032
  %v3161 = vmul.f32 %v2536, %v3033
  %v3162 = vmul.f32 %v2540, %v3034
  %v3163 = vmul.f32 %v2544, %v3035
  %v3164 = vmul.f32 %v2548, %v3036
  %v3165 = vmul.f32 %v2552, %v3037
  %v3166 = vmul.f32 %v2559, %v3038
  %v3167 = vmul.f32 %v2563, %v3039
  %v3168 = vmul.f32 %v2567, %v3040
  %v3169 = vmul.f32 %v2571, %v3041
  %v3170 = vmul.f32 %v2575, %v3042
  %v3171 = vmul.f32 %v2579, %v3043
  %v3172 = vmul.f32 %v2583, %v3044
  %v3173 = vmul.f32 %v2587, %v3045
  %v3174 = vmul.f32 %v2591, %v3046
  %v3175 = vmul.f32 %v2595, %v3047
  %v3176 = vmul.f32 %v2599, %v3048
  %v3177 = vmul.f32 %v2603, %v3049
  %v3178 = vmul.f32 %v2607, %v3050
  %v3179 = vmul.f32 %v2611, %v3051
  %v3180 = vmul.f32 %v2615, %v3052
  %v3181 = vmul.f32 %v2619, %v3053
  %v3182 = vmul.f32 %v2626, %v3054
  %v3183 = vmul.f32 %v2630, %v3055
  %v3184 = vmul.f32 %v2634, %v3056
  %v3185 = vmul.f32 %v2638, %v3057
  %v3186 = vmul.f32 %v2642, %v3058
  %v3187 = vmul.f32 %v2646, %v3059
  %v3188 = vmul.f32 %v2650, %v3060
  %v3189 = vmul.f32 %v2654, %v3061
  %v3190 = vmul.f32 %v2658, %v3062
  %v3191 = vmul.f32 %v2662, %v3063
  %v3192 = vmul.f32 %v2666, %v3064
  %v3193 = vmul.f32 %v2670, %v3065
  %v3194 = vmul.f32 %v2674, %v3066
  %v3195 = vmul.f32 %v2678, %v3067
  %v3196 = vmul.f32 %v2682, %v3068
  %v3197 = vmul.f32 %v2686, %v3069
  %v3198 = vmul.f32 %v2693, %v3070
  %v3199 = vmul.f32 %v2697, %v3071
  %v3200 = vmul.f32 %v2701, %v3072
  %v3201 = vmul.f32 %v2705, %v3073
  %v3202 = vmul.f32 %v2709, %v3074
  %v3203 = vmul.f32 %v2713, %v3075
  %v3204 = vmul.f32 %v2717, %v3076
  %v3205 = vmul.f32 %v2721, %v3077
  %v3206 = vmul.f32 %v2725, %v3078
  %v3207 = vmul.f32 %v2729, %v3079
  %v3208 = vmul.f32 %v2733, %v3080
  %v3209 = vmul.f32 %v2737, %v3081
  %v3210 = vmul.f32 %v2741, %v3082
  %v3211 = vmul.f32 %v2745, %v3083
  %v3212 = vmul.f32 %v2749, %v3084
  %v3213 = vmul.f32 %v2753, %v3085
  %v3214 = vmul.f32 %v2760, %v3086
  %v3215 = vmul.f32 %v2764, %v3087
  %v3216 = vmul.f32 %v2768, %v3088
  %v3217 = vmul.f32 %v2772, %v3089
  %v3218 = vmul.f32 %v2776, %v3090
  %v3219 = vmul.f32 %v2780, %v3091
  %v3220 = vmul.f32 %v2784, %v3092
  %v3221 = vmul.f32 %v2788, %v3093
  %v3222 = vmul.f32 %v2792, %v3094
  %v3223 = vmul.f32 %v2796, %v3095
  %v3224 = vmul.f32 %v2800, %v3096
  %v3225 = vmul.f32 %v2804, %v3097
  %v3226 = vmul.f32 %v2808, %v3098
  %v3227 = vmul.f32 %v2812, %v3099
  %v3228 = vmul.f32 %v2816, %v3100
  %v3229 = vmul.f32 %v2820, %v3101
  %v3230 = vmul.f32 %v2827, %v3102
  %v3231 = vmul.f32 %v2831, %v3103
  %v3232 = vmul.f32 %v2835, %v3104
  %v3233 = vmul.f32 %v2839, %v3105
  %v3234 = vmul.f32 %v2843, %v3106
  %v3235 = vmul.f32 %v2847, %v3107
  %v3236 = vmul.f32 %v2851, %v3108
  %v3237 = vmul.f32 %v2855, %v3109
  %v3238 = vmul.f32 %v2859, %v3110
  %v3239 = vmul.f32 %v2863, %v3111
  %v3240 = vmul.f32 %v2867, %v3112
  %v3241 = vmul.f32 %v2871, %v3113
  %v3242 = vmul.f32 %v2875, %v3114
  %v3243 = vmul.f32 %v2879, %v3115
  %v3244 = vmul.f32 %v2883, %v3116
  %v3245 = vmul.f32 %v2887, %v3117
  %v3246 = vmul.f32 %v2894, %v3118
  %v3247 = vmul.f32 %v2898, %v3119
  %v3248 = vmul.f32 %v2902, %v3120
  %v3249 = vmul.f32 %v2906, %v3121
  %v3250 = vmul.f32 %v2910, %v3122
  %v3251 = vmul.f32 %v2914, %v3123
  %v3252 = vmul.f32 %v2918, %v3124
  %v3253 = vmul.f32 %v2922, %v3125
  %v3254 = vmul.f32 %v2926, %v3126
  %v3255 = vmul.f32 %v2930, %v3127
  %v3256 = vmul.f32 %v2934, %v3128
  %v3257 = vmul.f32 %v2938, %v3129
  %v3258 = vmul.f32 %v2942, %v3130
  %v3259 = vmul.f32 %v2946, %v3131
  %v3260 = vmul.f32 %v2950, %v3132
  %v3261 = vmul.f32 %v2954, %v3133
  %v3262 = vmul.f32 %v2961, %v3134
  %v3263 = vmul.f32 %v2965, %v3135
  %v3264 = vmul.f32 %v2969, %v3136
  %v3265 = vmul.f32 %v2973, %v3137
  %v3266 = vmul.f32 %v2977, %v3138
  %v3267 = vmul.f32 %v2981, %v3139
  %v3268 = vmul.f32 %v2985, %v3140
  %v3269 = vmul.f32 %v2989, %v3141
  %v3270 = vmul.f32 %v2993, %v3142
  %v3271 = vmul.f32 %v2997, %v3143
  %v3272 = vmul.f32 %v3001, %v3144
  %v3273 = vmul.f32 %v3005, %v3145
  %v3274 = vmul.f32 %v3009, %v3146
  %v3275 = vmul.f32 %v3013, %v3147
  %v3276 = vmul.f32 %v3017, %v3148
  %v3277 = vmul.f32 %v3021, %v3149
  %v3278 = vadd.f32 %v3150, %v3151
  %v3279 = vadd.f32 %v3278, %v3152
  %v3280 = vadd.f32 %v3279, %v3153
  %v3281 = vadd.f32 %v3280, %v3154
  %v3282 = vadd.f32 %v3281, %v3155
  %v3283 = vadd.f32 %v3282, %v3156
  %v3284 = vadd.f32 %v3283, %v3157
  %v3285 = vadd.f32 %v3284, %v3158
  %v3286 = vadd.f32 %v3285, %v3159
  %v3287 = vadd.f32 %v3286, %v3160
  %v3288 = vadd.f32 %v3287, %v3161
  %v3289 = vadd.f32 %v3288, %v3162
  %v3290 = vadd.f32 %v3289, %v3163
  %v3291 = vadd.f32 %v3290, %v3164
  %v3292 = vadd.f32 %v3291, %v3165
  %v3293 = vrot.slane %v3292, 4
  %v3294 = vadd.f32 %v3292, %v3293
  %v3295 = vrot.slane %v3294, 2
  %v3296 = vadd.f32 %v3294, %v3295
  %v3297 = vrot.slane %v3296, 1
  %v3298 = vadd.f32 %v3296, %v3297
  %v3299 = vadd.f32 %v3166, %v3167
  %v3300 = vadd.f32 %v3299, %v3168
  %v3301 = vadd.f32 %v3300, %v3169
  %v3302 = vadd.f32 %v3301, %v3170
  %v3303 = vadd.f32 %v3302, %v3171
  %v3304 = vadd.f32 %v3303, %v3172
  %v3305 = vadd.f32 %v3304, %v3173
  %v3306 = vadd.f32 %v3305, %v3174
  %v3307 = vadd.f32 %v3306, %v3175
  %v3308 = vadd.f32 %v3307, %v3176
  %v3309 = vadd.f32 %v3308, %v3177
  %v3310 = vadd.f32 %v3309, %v3178
  %v3311 = vadd.f32 %v3310, %v3179
  %v3312 = vadd.f32 %v3311, %v3180
  %v3313 = vadd.f32 %v3312, %v3181
  %v3314 = vrot.slane %v3313, 4
  %v3315 = vadd.f32 %v3313, %v3314
  %v3316 = vrot.slane %v3315, 2
  %v3317 = vadd.f32 %v3315, %v3316
  %v3318 = vrot.slane %v3317, 1
  %v3319 = vadd.f32 %v3317, %v3318
  %v3320 = vadd.f32 %v3182, %v3183
  %v3321 = vadd.f32 %v3320, %v3184
  %v3322 = vadd.f32 %v3321, %v3185
  %v3323 = vadd.f32 %v3322, %v3186
  %v3324 = vadd.f32 %v3323, %v3187
  %v3325 = vadd.f32 %v3324, %v3188
  %v3326 = vadd.f32 %v3325, %v3189
  %v3327 = vadd.f32 %v3326, %v3190
  %v3328 = vadd.f32 %v3327, %v3191
  %v3329 = vadd.f32 %v3328, %v3192
  %v3330 = vadd.f32 %v3329, %v3193
  %v3331 = vadd.f32 %v3330, %v3194
  %v3332 = vadd.f32 %v3331, %v3195
  %v3333 = vadd.f32 %v3332, %v3196
  %v3334 = vadd.f32 %v3333, %v3197
  %v3335 = vrot.slane %v3334, 4
  %v3336 = vadd.f32 %v3334, %v3335
  %v3337 = vrot.slane %v3336, 2
  %v3338 = vadd.f32 %v3336, %v3337
  %v3339 = vrot.slane %v3338, 1
  %v3340 = vadd.f32 %v3338, %v3339
  %v3341 = vadd.f32 %v3198, %v3199
  %v3342 = vadd.f32 %v3341, %v3200
  %v3343 = vadd.f32 %v3342, %v3201
  %v3344 = vadd.f32 %v3343, %v3202
  %v3345 = vadd.f32 %v3344, %v3203
  %v3346 = vadd.f32 %v3345, %v3204
  %v3347 = vadd.f32 %v3346, %v3205
  %v3348 = vadd.f32 %v3347, %v3206
  %v3349 = vadd.f32 %v3348, %v3207
  %v3350 = vadd.f32 %v3349, %v3208
  %v3351 = vadd.f32 %v3350, %v3209
  %v3352 = vadd.f32 %v3351, %v3210
  %v3353 = vadd.f32 %v3352, %v3211
  %v3354 = vadd.f32 %v3353, %v3212
  %v3355 = vadd.f32 %v3354, %v3213
  %v3356 = vrot.slane %v3355, 4
  %v3357 = vadd.f32 %v3355, %v3356
  %v3358 = vrot.slane %v3357, 2
  %v3359 = vadd.f32 %v3357, %v3358
  %v3360 = vrot.slane %v3359, 1
  %v3361 = vadd.f32 %v3359, %v3360
  %v3362 = vadd.f32 %v3214, %v3215
  %v3363 = vadd.f32 %v3362, %v3216
  %v3364 = vadd.f32 %v3363, %v3217
  %v3365 = vadd.f32 %v3364, %v3218
  %v3366 = vadd.f32 %v3365, %v3219
  %v3367 = vadd.f32 %v3366, %v3220
  %v3368 = vadd.f32 %v3367, %v3221
  %v3369 = vadd.f32 %v3368, %v3222
  %v3370 = vadd.f32 %v3369, %v3223
  %v3371 = vadd.f32 %v3370, %v3224
  %v3372 = vadd.f32 %v3371, %v3225
  %v3373 = vadd.f32 %v3372, %v3226
  %v3374 = vadd.f32 %v3373, %v3227
  %v3375 = vadd.f32 %v3374, %v3228
  %v3376 = vadd.f32 %v3375, %v3229
  %v3377 = vrot.slane %v3376, 4
  %v3378 = vadd.f32 %v3376, %v3377
  %v3379 = vrot.slane %v3378, 2
  %v3380 = vadd.f32 %v3378, %v3379
  %v3381 = vrot.slane %v3380, 1
  %v3382 = vadd.f32 %v3380, %v3381
  %v3383 = vadd.f32 %v3230, %v3231
  %v3384 = vadd.f32 %v3383, %v3232
  %v3385 = vadd.f32 %v3384, %v3233
  %v3386 = vadd.f32 %v3385, %v3234
  %v3387 = vadd.f32 %v3386, %v3235
  %v3388 = vadd.f32 %v3387, %v3236
  %v3389 = vadd.f32 %v3388, %v3237
  %v3390 = vadd.f32 %v3389, %v3238
  %v3391 = vadd.f32 %v3390, %v3239
  %v3392 = vadd.f32 %v3391, %v3240
  %v3393 = vadd.f32 %v3392, %v3241
  %v3394 = vadd.f32 %v3393, %v3242
  %v3395 = vadd.f32 %v3394, %v3243
  %v3396 = vadd.f32 %v3395, %v3244
  %v3397 = vadd.f32 %v3396, %v3245
  %v3398 = vrot.slane %v3397, 4
  %v3399 = vadd.f32 %v3397, %v3398
  %v3400 = vrot.slane %v3399, 2
  %v3401 = vadd.f32 %v3399, %v3400
  %v3402 = vrot.slane %v3401, 1
  %v3403 = vadd.f32 %v3401, %v3402
  %v3404 = vadd.f32 %v3246, %v3247
  %v3405 = vadd.f32 %v3404, %v3248
  %v3406 = vadd.f32 %v3405, %v3249
  %v3407 = vadd.f32 %v3406, %v3250
  %v3408 = vadd.f32 %v3407, %v3251
  %v3409 = vadd.f32 %v3408, %v3252
  %v3410 = vadd.f32 %v3409, %v3253
  %v3411 = vadd.f32 %v3410, %v3254
  %v3412 = vadd.f32 %v3411, %v3255
  %v3413 = vadd.f32 %v3412, %v3256
  %v3414 = vadd.f32 %v3413, %v3257
  %v3415 = vadd.f32 %v3414, %v3258
  %v3416 = vadd.f32 %v3415, %v3259
  %v3417 = vadd.f32 %v3416, %v3260
  %v3418 = vadd.f32 %v3417, %v3261
  %v3419 = vrot.slane %v3418, 4
  %v3420 = vadd.f32 %v3418, %v3419
  %v3421 = vrot.slane %v3420, 2
  %v3422 = vadd.f32 %v3420, %v3421
  %v3423 = vrot.slane %v3422, 1
  %v3424 = vadd.f32 %v3422, %v3423
  %v3425 = vadd.f32 %v3262, %v3263
  %v3426 = vadd.f32 %v3425, %v3264
  %v3427 = vadd.f32 %v3426, %v3265
  %v3428 = vadd.f32 %v3427, %v3266
  %v3429 = vadd.f32 %v3428, %v3267
  %v3430 = vadd.f32 %v3429, %v3268
  %v3431 = vadd.f32 %v3430, %v3269
  %v3432 = vadd.f32 %v3431, %v3270
  %v3433 = vadd.f32 %v3432, %v3271
  %v3434 = vadd.f32 %v3433, %v3272
  %v3435 = vadd.f32 %v3434, %v3273
  %v3436 = vadd.f32 %v3435, %v3274
  %v3437 = vadd.f32 %v3436, %v3275
  %v3438 = vadd.f32 %v3437, %v3276
  %v3439 = vadd.f32 %v3438, %v3277
  %v3440 = vrot.slane %v3439, 4
  %v3441 = vadd.f32 %v3439, %v3440
  %v3442 = vrot.slane %v3441, 2
  %v3443 = vadd.f32 %v3441, %v3442
  %v3444 = vrot.slane %v3443, 1
  %v3445 = vadd.f32 %v3443, %v3444
  %v3446 = vpack.c.bf16 %v3298, %v3298
  %v3447 = vpack.c.bf16 %v3319, %v3319
  %v3448 = vpack.c.bf16 %v3340, %v3340
  %v3449 = vpack.c.bf16 %v3361, %v3361
  %v3450 = vpack.c.bf16 %v3382, %v3382
  %v3451 = vpack.c.bf16 %v3403, %v3403
  %v3452 = vpack.c.bf16 %v3424, %v3424
  %v3453 = vpack.c.bf16 %v3445, %v3445
  %v3454 = vld [vmem:[%s4] sm:$0xf]
  %v3455 = vld [vmem:[%s4 + $0x4] sm:$0xf]
  %v3456 = vld [vmem:[%s4 + $0x8] sm:$0xf]
  %v3457 = vld [vmem:[%s4 + $0xc] sm:$0xf]
  %v3458 = vld [vmem:[%s4 + $0x10] sm:$0xf]
  %v3459 = vld [vmem:[%s4 + $0x14] sm:$0xf]
  %v3460 = vld [vmem:[%s4 + $0x18] sm:$0xf]
  %v3461 = vld [vmem:[%s4 + $0x1c] sm:$0xf]
  %v3462 = vld [vmem:[%s4 + $0x20] sm:$0xf]
  %v3463 = vld [vmem:[%s4 + $0x24] sm:$0xf]
  %v3464 = vld [vmem:[%s4 + $0x28] sm:$0xf]
  %v3465 = vld [vmem:[%s4 + $0x2c] sm:$0xf]
  %v3466 = vld [vmem:[%s4 + $0x30] sm:$0xf]
  %v3467 = vld [vmem:[%s4 + $0x34] sm:$0xf]
  %v3468 = vld [vmem:[%s4 + $0x38] sm:$0xf]
  %v3469 = vld [vmem:[%s4 + $0x3c] sm:$0xf]
  %v3470 = vld [vmem:[%s5] sm:$0x1]
  %v3472 = vlaneseq
  %v3473 = vshrl.u32 %v3472, 7
  %v3474 = vsub.s32 0, %v3473
  %v3475 = vrot.slane %v3470, %v3474
  %v3485 = vunpack.c.l.b16 %v3446
  %v3486 = vunpack.c.l.b16 %v3447
  %v3487 = vunpack.c.l.b16 %v3448
  %v3488 = vunpack.c.l.b16 %v3449
  %v3489 = vunpack.c.l.b16 %v3450
  %v3490 = vunpack.c.l.b16 %v3451
  %v3491 = vunpack.c.l.b16 %v3452
  %v3492 = vunpack.c.l.b16 %v3453
  %v3493 = vsel %vm2460, %v3486, %v3485
  %v3494 = vsel %vm2462, %v3487, %v3493
  %v3495 = vsel %vm2464, %v3488, %v3494
  %v3496 = vsel %vm2466, %v3489, %v3495
  %v3497 = vsel %vm2468, %v3490, %v3496
  %v3498 = vsel %vm2470, %v3491, %v3497
  %v3499 = vsel %vm2472, %v3492, %v3498
  %v3500 = vpack.c.b16 %v3499, %v3499
  %v3518 = vunpack.c.l.b16 %v3454
  %v3519 = vunpack.c.l.b16 %v3455
  %v3520 = vunpack.c.l.b16 %v3456
  %v3521 = vunpack.c.l.b16 %v3457
  %v3522 = vunpack.c.l.b16 %v3458
  %v3523 = vunpack.c.l.b16 %v3459
  %v3524 = vunpack.c.l.b16 %v3460
  %v3525 = vunpack.c.l.b16 %v3461
  %v3526 = vunpack.c.l.b16 %v3462
  %v3527 = vunpack.c.l.b16 %v3463
  %v3528 = vunpack.c.l.b16 %v3464
  %v3529 = vunpack.c.l.b16 %v3465
  %v3530 = vunpack.c.l.b16 %v3466
  %v3531 = vunpack.c.l.b16 %v3467
  %v3532 = vunpack.c.l.b16 %v3468
  %v3533 = vunpack.c.l.b16 %v3469
  %v3534 = vpack.c.b16 %v3519, %v3518
  %v3535 = vpack.c.b16 %v3521, %v3520
  %v3536 = vpack.c.b16 %v3523, %v3522
  %v3537 = vpack.c.b16 %v3525, %v3524
  %v3538 = vpack.c.b16 %v3527, %v3526
  %v3539 = vpack.c.b16 %v3529, %v3528
  %v3540 = vpack.c.b16 %v3531, %v3530
  %v3541 = vpack.c.b16 %v3533, %v3532
  %3550 = vmatprep.subr.bf16.mxu0 0
  %3551 = vmatpush1.bf16.msra.mxu0 %v3534
  %3552 = vmatprep.subr.bf16.mxu0 0
  %3553 = vmatpush1.bf16.msra.mxu0 %v3535
  %3554 = vmatprep.subr.bf16.mxu0 0
  %3555 = vmatpush1.bf16.msra.mxu0 %v3536
  %3556 = vmatprep.subr.bf16.mxu0 0
  %3557 = vmatpush1.bf16.msra.mxu0 %v3537
  %3558 = vmatprep.subr.bf16.mxu0 0
  %3559 = vmatpush1.bf16.msra.mxu0 %v3538
  %3560 = vmatprep.subr.bf16.mxu0 0
  %3561 = vmatpush1.bf16.msra.mxu0 %v3539
  %3562 = vmatprep.subr.bf16.mxu0 0
  %3563 = vmatpush1.bf16.msra.mxu0 %v3540
  %3564 = vmatprep.subr.bf16.mxu0 0
  %3565 = vmatpush1.bf16.msra.mxu0 %v3541
  %3566 = vmatprep.subr.bf16.mxu0 0
  %3567 = vmatpush1.bf16.msra.mxu0 0
  %3568 = vmatprep.subr.bf16.mxu0 0
  %3569 = vmatpush1.bf16.msra.mxu0 0
  %3570 = vmatprep.subr.bf16.mxu0 0
  %3571 = vmatpush1.bf16.msra.mxu0 0
  %3572 = vmatprep.subr.bf16.mxu0 0
  %3573 = vmatpush1.bf16.msra.mxu0 0
  %3574 = vmatprep.subr.bf16.mxu0 0
  %3575 = vmatpush1.bf16.msra.mxu0 0
  %3576 = vmatprep.subr.bf16.mxu0 0
  %3577 = vmatpush1.bf16.msra.mxu0 0
  %3578 = vmatprep.subr.bf16.mxu0 0
  %3579 = vmatpush1.bf16.msra.mxu0 0
  %3580 = vmatprep.subr.bf16.mxu0 0
  %3581 = vmatpush1.bf16.msra.mxu0 0
  %3582 = vmatprep.mubr.bf16.mxu0 0
  %3583 = vmatmul.mubr.bf16.gmra.mrb[0].mxu0 %v3500
  %v3584 = vpop.f32.mrb[0].mxu0
  %v3585 = vadd.f32 %v3475, %v3584
  %v3586 = vpop.f32.mrb[0].mxu0
  %v3587 = vpop.f32.mrb[0].mxu0
  %v3588 = vpop.f32.mrb[0].mxu0
  %3589 = vdwg.mxu0
  %3590 = vst [vmem:[%s6] sm:$0xff] %v3585
  // Predicated region
  $region26: #{attentive_pooling_forward.1} parent=0 // pred_check
    _
  $region27: #{attentive_pooling_forward.1} parent=0 // pred_check_branch
    %3592 = sbr.rel (0) target = $region29
  $region28: #{attentive_pooling_forward.1} parent=0 // pred_region
    _
  $region29: #{attentive_pooling_forward.1} parent=0 // pred_fallthru
    _
  // Predicated region
  $region30: #{attentive_pooling_forward.1} parent=0 // pred_check
    _
  $region31: #{attentive_pooling_forward.1} parent=0 // pred_check_branch
    %3594 = sbr.rel (0) target = $region33
  $region32: #{attentive_pooling_forward.1} parent=0 // pred_region
    _
  $region33: #{attentive_pooling_forward.1} parent=0 // pred_fallthru
    _
  // Predicated region
  $region34: #{attentive_pooling_forward.1} parent=0 // pred_check
    _
  $region35: #{attentive_pooling_forward.1} parent=0 // pred_check_branch
    %3596 = sbr.rel (0) target = $region37
  $region36: #{attentive_pooling_forward.1} parent=0 // pred_region
    _
  $region37: #{attentive_pooling_forward.1} parent=0 // pred_fallthru
    _
  // Predicated region
  $region38: #{attentive_pooling_forward.1} parent=0 // pred_check
    _
  $region39: #{attentive_pooling_forward.1} parent=0 // pred_check_branch
    %3598 = sbr.rel (0) target = $region41
  $region40: #{attentive_pooling_forward.1} parent=0 // pred_region
    _
  $region41: #{attentive_pooling_forward.1} parent=0 // pred_fallthru
    _

</llo_original>
